<compile_context>
chip_gen: v6e
topology: v6e:2x2x1
jax: 0.10.0
libtpu: 0.0.40
codegen_flags: <defaults>
</compile_context>

<pallas_src>
import jax
import jax.numpy as jnp
from jax import lax
from jax.experimental import pallas as pl
from jax.experimental.pallas import tpu as pltpu


SOURCES = ("voice", "drums", "bass", "other")            # torch.cat order
_VMEM = pl.BlockSpec(memory_space=pltpu.MemorySpace.VMEM)


# ------------------------------ Pallas kernel -------------------------------

def _autoencoder_kernel(x_ref, we_ref, be_ref, wlf_ref, blf_ref,
                        wbr_ref, bbr_ref, wd_ref, bd_ref, out_ref):
    """Entire AutoEncoder forward in one body (everything resident in VMEM).

    x_ref  : (B, Cin*H*W)        flat NCHW input rows
    we/be  : (Cin*H*W, Cver*Ho)  encoder = Conv2d o Conv2d composed at pack time
    wlf/blf: (Cver*Ho, 128)      layer_first
    wbr/bbr: (128, S*Cver*Ho)    the 4 branch linears batched along lanes
    wd/bd  : (S, Cver*Ho, 2*Hd*Kw), (1, S*2*Hd*Kw)
                                 per-source decoder = ConvT o ConvT composed
    out_ref: (B, S*2*Hd*Kw)      lane-dense, torch NCHW cat order
    """
    f32 = jnp.float32
    # encoder (no activation in the torch module's encoder)
    enc = jnp.dot(x_ref[...], we_ref[...], preferred_element_type=f32) + be_ref[...]
    # layer_first: Linear + ReLU
    lo = jnp.maximum(
        jnp.dot(enc, wlf_ref[...], preferred_element_type=f32) + blf_ref[...], 0.0)
    # layer_voice / drums / bass / other batched into one 256-lane matmul + ReLU
    hbr = jnp.maximum(
        jnp.dot(lo, wbr_ref[...], preferred_element_type=f32) + bbr_ref[...], 0.0)

    S, F, _ = wd_ref.shape                      # S=4 sources, F=Cver*Ho=64
    decs = []
    for s in range(S):                          # static unroll over sources
        h_s = hbr[:, s * F:(s + 1) * F]         # lane slice of an in-register value
        decs.append(jnp.dot(h_s, wd_ref[s], preferred_element_type=f32))
    # torch.cat over sources + bias + final ReLU, one lane-dense store
    out_ref[...] = jnp.maximum(jnp.concatenate(decs, axis=1) + bd_ref[...], 0.0)


# ------------------------------ forward (1 launch) ---------------------------

def autoencoder_forward(w, x):
    B, Cin, H, W = x.shape
    S = w["wd"].shape[0]
    n_out = w["bd"].shape[1]                            # S * 2 * Hd * Kw (= 2*S*H*W)

    out_flat = pl.pallas_call(
        _autoencoder_kernel,
        out_shape=jax.ShapeDtypeStruct((B, n_out), jnp.float32),
        in_specs=[_VMEM] * 9,
        out_specs=_VMEM,
    )(x.reshape(B, Cin * H * W),                        # contiguous -> bitcast, no transpose
      w["we"], w["be"], w["wlf"], w["blf"], w["wbr"], w["bbr"], w["wd"], w["bd"])

    # (s, cout, ho, wo) lane order == torch cat/NCHW order -> contiguous reshape.
    return out_flat.reshape(B, 2 * S, H, W)


# ------------------------- one-time parameter packing ------------------------

def pack_params(p, H=20):
    """Compose conv / conv-transpose pairs into dense matrices, once, off the hot path.

    Feature orders are chosen to match torch's .view() flattening exactly, so the
    linear-layer weights need no permutation and the kernel output is already in
    torch NCHW cat order.
    """
    f32 = jnp.float32
    Chor, Cin, _, Kw = p["e1_w"].shape
    Cver, _, Kh, _ = p["e2_w"].shape
    hidden = p["lf_w"].shape[0]
    S = len(SOURCES)
    Ho = H - Kh + 1                                       # 16
    Hd = Ho + Kh - 1                                      # 20 (== H)
    assert Cver * Ho == p["lf_w"].shape[1], \
        "module hard-codes Linear(num_ch_out_ver * 16, 128); need H - Kh + 1 == 16"

    w = {}

    # --- encoder: Conv2d(2,Chor,(1,Kw)) o Conv2d(Chor,Cver,(Kh,1)) as one matrix.
    # enc[cv,ho] = sum_{ci,h,w} x[ci,h,w] * We[(ci,h,w),(cv,ho)]  (+ bias)
    W1 = p["e1_w"][:, :, 0, :].astype(f32)                # (Chor, Cin, Kw)
    W2 = p["e2_w"][:, :, :, 0].astype(f32)                # (Cver, Chor, Kh)
    Te = jnp.einsum("oiw,vok->ikwv", W1, W2)              # (Cin, Kh, Kw, Cver)
    We = jnp.zeros((Cin, H, Kw, Cver, Ho), f32)
    for ho in range(Ho):                                  # h = ho + kh
        We = We.at[:, ho:ho + Kh, :, :, ho].set(Te)
    w["we"] = We.reshape(Cin * H * Kw, Cver * Ho)         # rows: torch x.view(B,-1) order
    be_c = jnp.einsum("vok,o->v", W2, p["e1_b"]) + p["e2_b"]          # (Cver,)
    w["be"] = jnp.repeat(be_c, Ho).reshape(1, Cver * Ho)  # cols: cv*Ho + ho (torch order)

    # --- layer_first (torch order needs no permutation)
    w["wlf"] = p["lf_w"].T                                # (Cver*Ho, 128)
    w["blf"] = p["lf_b"].reshape(1, hidden)

    # --- the 4 branch linears batched along lanes, torch cat (source) order
    w["wbr"] = jnp.concatenate([p[f"l_{s}_w"].T for s in SOURCES], axis=1)   # (128, 256)
    w["bbr"] = jnp.concatenate([p[f"l_{s}_b"] for s in SOURCES]).reshape(1, S * Cver * Ho)

    # --- decoder: ConvT(Cver,Chor,(Kh,1)) o ConvT(Chor,2,(1,Kw)) per source.
    # out_s[cout,ho,wo] = sum_{cv,hi} h_s[cv,hi] * Wd_s[(cv,hi),(cout,ho,wo)]  (+ bias)
    wds, bds = [], []
    for s in SOURCES:
        U1 = p[f"d1_{s}_w"][:, :, :, 0].astype(f32)       # (Cver, Chor, Kh)
        U2 = p[f"d2_{s}_w"][:, :, 0, :].astype(f32)       # (Chor, 2, Kw)
        Td = jnp.einsum("vok,ocw->vckw", U1, U2)          # (Cver, 2, Kh, Kw)
        Wd = jnp.zeros((Cver, Ho, 2, Hd, Kw), f32)
        for hi in range(Ho):                              # ho = hi + kh
            Wd = Wd.at[:, hi, :, hi:hi + Kh, :].set(Td)
        wds.append(Wd.reshape(Cver * Ho, 2 * Hd * Kw))    # (64, 360)
        bvec = jnp.einsum("o,ocw->cw", p[f"d1_{s}_b"], U2) + p[f"d2_{s}_b"][:, None]
        bds.append(jnp.broadcast_to(bvec[:, None, :], (2, Hd, Kw)).reshape(2 * Hd * Kw))
    w["wd"] = jnp.stack(wds, axis=0)                      # (S, 64, 360)
    w["bd"] = jnp.concatenate(bds).reshape(1, S * 2 * Hd * Kw)          # (1, 1440)
    return w


# ------------------------------ parameters ----------------------------------

def init_params(key, Chor=8, Cver=4, Kh=5, Kw=9, hidden=128):
    ks = iter(jax.random.split(key, 64))

    def u(shape, fan_in):
        bound = 1.0 / jnp.sqrt(float(fan_in))
        return jax.random.uniform(next(ks), shape, jnp.float32, -bound, bound)

    p = {}
    # encoder: Conv2d(2, Chor, (1,Kw)); Conv2d(Chor, Cver, (Kh,1))
    p["e1_w"] = u((Chor, 2, 1, Kw), 2 * Kw)
    p["e1_b"] = u((Chor,), 2 * Kw)
    p["e2_w"] = u((Cver, Chor, Kh, 1), Chor * Kh)
    p["e2_b"] = u((Cver,), Chor * Kh)
    feat = Cver * 16
    p["lf_w"] = u((hidden, feat), feat)
    p["lf_b"] = u((hidden,), feat)
    for s in SOURCES:
        p[f"l_{s}_w"] = u((feat, hidden), hidden)
        p[f"l_{s}_b"] = u((feat,), hidden)
        p[f"d1_{s}_w"] = u((Cver, Chor, Kh, 1), Cver * Kh)
        p[f"d1_{s}_b"] = u((Chor,), Cver * Kh)
        p[f"d2_{s}_w"] = u((Chor, 2, 1, Kw), Chor * Kw)
        p[f"d2_{s}_b"] = u((2,), Chor * Kw)
    return p


# --------------------------- pure-JAX reference -----------------------------

def reference_forward(params, x):
    Cver = params["e2_w"].shape[0]
    dn = ("NCHW", "OIHW", "NCHW")

    def conv(x, w, b):
        y = lax.conv_general_dilated(x, w, (1, 1), "VALID", dimension_numbers=dn)
        return y + b.reshape(1, -1, 1, 1)

    def convT(x, w, b):
        Kh, Kw = w.shape[2], w.shape[3]
        xp = jnp.pad(x, ((0, 0), (0, 0), (Kh - 1, Kh - 1), (Kw - 1, Kw - 1)))
        wc = jnp.flip(w, axis=(2, 3)).transpose(1, 0, 2, 3)
        return conv(xp, wc, b)

    def lin(x, w, b, relu):
        y = x @ w.T + b
        return jnp.maximum(y, 0.0) if relu else y

    B = x.shape[0]
    enc = conv(conv(x, params["e1_w"], params["e1_b"]), params["e2_w"], params["e2_b"])
    lf = lin(enc.reshape(B, -1), params["lf_w"], params["lf_b"], True)
    outs = []
    for s in SOURCES:
        h = lin(lf, params[f"l_{s}_w"], params[f"l_{s}_b"], True).reshape(B, Cver, 16, 1)
        d = convT(convT(h, params[f"d1_{s}_w"], params[f"d1_{s}_b"]),
                  params[f"d2_{s}_w"], params[f"d2_{s}_b"])
        outs.append(d)
    return jnp.maximum(jnp.concatenate(outs, axis=1), 0.0)


# ---------------------------------- main ------------------------------------

if __name__ == "__main__":
    Chor, Cver, Kh, Kw = 8, 4, 5, 9
    B, H, W = 2, 20, 9            # encoder -> (B, Cver, 16, 1), matching "Cver * 16"

    key = jax.random.PRNGKey(0)
    pkey, xkey = jax.random.split(key)
    params = init_params(pkey, Chor, Cver, Kh, Kw)
    packed = pack_params(params, H=H)                     # one-time repack, off hot path
    x = jax.random.normal(xkey, (B, 2, H, W), jnp.float32)

    fwd = jax.jit(autoencoder_forward)
    out = jax.block_until_ready(fwd(packed, x))
    assert out.shape == (B, 8, H, W), out.shape

    ref = reference_forward(params, x)
    max_err = float(jnp.max(jnp.abs(out - ref)))
    assert jnp.allclose(out, ref, atol=1e-4, rtol=1e-4), max_err

    print("KERNEL_OK")
</pallas_src>

<mosaic_0001>
module attributes {stable_mosaic.version = 11 : i64} {
  func.func @_autoencoder_kernel(%arg0: memref<2x360xf32, #tpu.memory_space<vmem>>, %arg1: memref<360x64xf32, #tpu.memory_space<vmem>>, %arg2: memref<1x64xf32, #tpu.memory_space<vmem>>, %arg3: memref<64x128xf32, #tpu.memory_space<vmem>>, %arg4: memref<1x128xf32, #tpu.memory_space<vmem>>, %arg5: memref<128x256xf32, #tpu.memory_space<vmem>>, %arg6: memref<1x256xf32, #tpu.memory_space<vmem>>, %arg7: memref<4x64x360xf32, #tpu.memory_space<vmem>>, %arg8: memref<1x1440xf32, #tpu.memory_space<vmem>>, %arg9: memref<2x1440xf32, #tpu.memory_space<vmem>>) attributes {dimension_semantics = [], scalar_prefetch = 0 : i64, scratch_operands = 0 : i64, tpu.core_type = #tpu.core_type<tc>} {
    %c0 = arith.constant 0 : index
    %c0_0 = arith.constant 0 : index
    %0 = vector.load %arg0[%c0, %c0_0] : memref<2x360xf32, #tpu.memory_space<vmem>>, vector<2x360xf32>
    %c0_1 = arith.constant 0 : index
    %c0_2 = arith.constant 0 : index
    %1 = vector.load %arg1[%c0_1, %c0_2] : memref<360x64xf32, #tpu.memory_space<vmem>>, vector<360x64xf32>
    %cst = arith.constant dense<0.000000e+00> : vector<2x64xf32>
    %2 = tpu.matmul %0, %1, %cst {dimension_numbers = #tpu.dot_dimension_numbers<[1], [0], [0], [1], [0, 0, 1, 1], [], []>} : vector<2x360xf32>, vector<360x64xf32>, vector<2x64xf32> -> vector<2x64xf32>
    %c0_3 = arith.constant 0 : index
    %c0_4 = arith.constant 0 : index
    %3 = vector.load %arg2[%c0_3, %c0_4] : memref<1x64xf32, #tpu.memory_space<vmem>>, vector<1x64xf32>
    %4 = vector.broadcast %3 : vector<1x64xf32> to vector<2x64xf32>
    %5 = arith.addf %2, %4 : vector<2x64xf32>
    %c0_5 = arith.constant 0 : index
    %c0_6 = arith.constant 0 : index
    %6 = vector.load %arg3[%c0_5, %c0_6] : memref<64x128xf32, #tpu.memory_space<vmem>>, vector<64x128xf32>
    %cst_7 = arith.constant dense<0.000000e+00> : vector<2x128xf32>
    %7 = tpu.matmul %5, %6, %cst_7 {dimension_numbers = #tpu.dot_dimension_numbers<[1], [0], [0], [1], [0, 0, 1, 1], [], []>} : vector<2x64xf32>, vector<64x128xf32>, vector<2x128xf32> -> vector<2x128xf32>
    %c0_8 = arith.constant 0 : index
    %c0_9 = arith.constant 0 : index
    %8 = vector.load %arg4[%c0_8, %c0_9] : memref<1x128xf32, #tpu.memory_space<vmem>>, vector<1x128xf32>
    %9 = vector.broadcast %8 : vector<1x128xf32> to vector<2x128xf32>
    %10 = arith.addf %7, %9 : vector<2x128xf32>
    %cst_10 = arith.constant 0.000000e+00 : f32
    %11 = vector.broadcast %cst_10 : f32 to vector<2x128xf32>
    %12 = arith.maximumf %10, %11 : vector<2x128xf32>
    %c0_11 = arith.constant 0 : index
    %c0_12 = arith.constant 0 : index
    %13 = vector.load %arg5[%c0_11, %c0_12] : memref<128x256xf32, #tpu.memory_space<vmem>>, vector<128x256xf32>
    %cst_13 = arith.constant dense<0.000000e+00> : vector<2x256xf32>
    %14 = tpu.matmul %12, %13, %cst_13 {dimension_numbers = #tpu.dot_dimension_numbers<[1], [0], [0], [1], [0, 0, 1, 1], [], []>} : vector<2x128xf32>, vector<128x256xf32>, vector<2x256xf32> -> vector<2x256xf32>
    %c0_14 = arith.constant 0 : index
    %c0_15 = arith.constant 0 : index
    %15 = vector.load %arg6[%c0_14, %c0_15] : memref<1x256xf32, #tpu.memory_space<vmem>>, vector<1x256xf32>
    %16 = vector.broadcast %15 : vector<1x256xf32> to vector<2x256xf32>
    %17 = arith.addf %14, %16 : vector<2x256xf32>
    %cst_16 = arith.constant 0.000000e+00 : f32
    %18 = vector.broadcast %cst_16 : f32 to vector<2x256xf32>
    %19 = arith.maximumf %17, %18 : vector<2x256xf32>
    %20 = vector.extract_strided_slice %19 {offsets = [0, 0], sizes = [2, 64], strides = [1, 1]} : vector<2x256xf32> to vector<2x64xf32>
    %c0_17 = arith.constant 0 : index
    %c0_18 = arith.constant 0 : index
    %c0_19 = arith.constant 0 : index
    %21 = vector.load %arg7[%c0_17, %c0_18, %c0_19] : memref<4x64x360xf32, #tpu.memory_space<vmem>>, vector<1x64x360xf32>
    %22 = vector.shape_cast %21 : vector<1x64x360xf32> to vector<64x360xf32>
    %cst_20 = arith.constant dense<0.000000e+00> : vector<2x360xf32>
    %23 = tpu.matmul %20, %22, %cst_20 {dimension_numbers = #tpu.dot_dimension_numbers<[1], [0], [0], [1], [0, 0, 1, 1], [], []>} : vector<2x64xf32>, vector<64x360xf32>, vector<2x360xf32> -> vector<2x360xf32>
    %24 = vector.extract_strided_slice %19 {offsets = [0, 64], sizes = [2, 64], strides = [1, 1]} : vector<2x256xf32> to vector<2x64xf32>
    %c1 = arith.constant 1 : index
    %c0_21 = arith.constant 0 : index
    %c0_22 = arith.constant 0 : index
    %25 = vector.load %arg7[%c1, %c0_21, %c0_22] : memref<4x64x360xf32, #tpu.memory_space<vmem>>, vector<1x64x360xf32>
    %26 = vector.shape_cast %25 : vector<1x64x360xf32> to vector<64x360xf32>
    %cst_23 = arith.constant dense<0.000000e+00> : vector<2x360xf32>
    %27 = tpu.matmul %24, %26, %cst_23 {dimension_numbers = #tpu.dot_dimension_numbers<[1], [0], [0], [1], [0, 0, 1, 1], [], []>} : vector<2x64xf32>, vector<64x360xf32>, vector<2x360xf32> -> vector<2x360xf32>
    %28 = vector.extract_strided_slice %19 {offsets = [0, 128], sizes = [2, 64], strides = [1, 1]} : vector<2x256xf32> to vector<2x64xf32>
    %c2 = arith.constant 2 : index
    %c0_24 = arith.constant 0 : index
    %c0_25 = arith.constant 0 : index
    %29 = vector.load %arg7[%c2, %c0_24, %c0_25] : memref<4x64x360xf32, #tpu.memory_space<vmem>>, vector<1x64x360xf32>
    %30 = vector.shape_cast %29 : vector<1x64x360xf32> to vector<64x360xf32>
    %cst_26 = arith.constant dense<0.000000e+00> : vector<2x360xf32>
    %31 = tpu.matmul %28, %30, %cst_26 {dimension_numbers = #tpu.dot_dimension_numbers<[1], [0], [0], [1], [0, 0, 1, 1], [], []>} : vector<2x64xf32>, vector<64x360xf32>, vector<2x360xf32> -> vector<2x360xf32>
    %32 = vector.extract_strided_slice %19 {offsets = [0, 192], sizes = [2, 64], strides = [1, 1]} : vector<2x256xf32> to vector<2x64xf32>
    %c3 = arith.constant 3 : index
    %c0_27 = arith.constant 0 : index
    %c0_28 = arith.constant 0 : index
    %33 = vector.load %arg7[%c3, %c0_27, %c0_28] : memref<4x64x360xf32, #tpu.memory_space<vmem>>, vector<1x64x360xf32>
    %34 = vector.shape_cast %33 : vector<1x64x360xf32> to vector<64x360xf32>
    %cst_29 = arith.constant dense<0.000000e+00> : vector<2x360xf32>
    %35 = tpu.matmul %32, %34, %cst_29 {dimension_numbers = #tpu.dot_dimension_numbers<[1], [0], [0], [1], [0, 0, 1, 1], [], []>} : vector<2x64xf32>, vector<64x360xf32>, vector<2x360xf32> -> vector<2x360xf32>
    %36 = tpu.concatenate %23, %27, %31, %35 in 1 : vector<2x360xf32>, vector<2x360xf32>, vector<2x360xf32>, vector<2x360xf32> -> vector<2x1440xf32>
    %c0_30 = arith.constant 0 : index
    %c0_31 = arith.constant 0 : index
    %37 = vector.load %arg8[%c0_30, %c0_31] : memref<1x1440xf32, #tpu.memory_space<vmem>>, vector<1x1440xf32>
    %38 = vector.broadcast %37 : vector<1x1440xf32> to vector<2x1440xf32>
    %39 = arith.addf %36, %38 : vector<2x1440xf32>
    %cst_32 = arith.constant 0.000000e+00 : f32
    %40 = vector.broadcast %cst_32 : f32 to vector<2x1440xf32>
    %41 = arith.maximumf %39, %40 : vector<2x1440xf32>
    %c0_33 = arith.constant 0 : index
    %c0_34 = arith.constant 0 : index
    %42 = vector.load %arg9[%c0_33, %c0_34] : memref<2x1440xf32, #tpu.memory_space<vmem>>, vector<2x1440xf32>
    tpu.vector_store %arg9[%c0_33, %c0_34], %41 {strides = array<i32>} : memref<2x1440xf32, #tpu.memory_space<vmem>>, vector<2x1440xf32>,
    return
  }
}

</mosaic_0001>

<llo_original>
// kernel: autoencoder_forward.1
$region0: #{autoencoder_forward.1}
  #allocation0 [shape = 'u32[]', space=smem, size = 0x4, offset = 0x4, fixed_abs, tag = 'smem constant byte address 0x4 - core index']
  #allocation1 [shape = 'u32[144,128]{1,0:T(1,128)}', space=vmem, size = 0x12000, scoped, tag = 'internal scratch']
  %s0 = inlined_call_operand.vmem [shape: f32[2,360], index: 0, kind: input, shape index: {}]
  %s1 = inlined_call_operand.vmem [shape: f32[360,64], index: 1, kind: input, shape index: {}]
  %s2 = inlined_call_operand.vmem [shape: f32[1,64], index: 2, kind: input, shape index: {}]
  %s3 = inlined_call_operand.hbm [shape: f32[64,128], index: 3, kind: input, shape index: {}]
  %s4 = inlined_call_operand.vmem [shape: f32[1,128], index: 4, kind: input, shape index: {}]
  %s5 = inlined_call_operand.hbm [shape: f32[128,256], index: 5, kind: input, shape index: {}]
  %s6 = inlined_call_operand.vmem [shape: f32[1,256], index: 6, kind: input, shape index: {}]
  %s7 = inlined_call_operand.vmem [shape: f32[4,64,360], index: 7, kind: input, shape index: {}]
  %s8 = inlined_call_operand.vmem [shape: f32[1,1440], index: 8, kind: input, shape index: {}]
  %s9 = inlined_call_operand.vmem [shape: f32[2,1440], index: 9, kind: output, shape index: {}]
  %s10 = sld [smem:[#allocation0]]
  $region54: #{autoencoder_forward.1} parent=0
    _
  %s12 = ssub.s32 1, %s10
  %s13 = scalar_select 0, %s12, %s10
  $region1: #{autoencoder_forward.1} parent=0
    #allocation2 [shape = 'u8[32768]{0}', space=vmem, size = 0x8000, scoped, tag = 'input window, operand 3, single buffered']
    #allocation3 [shape = 's32[1]{0}', space=sflag, size = 0x4, scoped, tag = 'scoped memory for autoencoder_forward.1']
    #allocation4 [shape = 'u8[131072]{0}', space=vmem, size = 0x20000, scoped, tag = 'input window, operand 5, single buffered']
    #allocation5 [shape = 's32[1]{0}', space=sflag, size = 0x4, scoped, tag = 'scoped memory for autoencoder_forward.1']
    %14 = vsyncpa [#allocation3], 0
    %15 = vsyncpa [#allocation5], 0
    // Predicated region
    $region2: #{autoencoder_forward.1} parent=1 // pred_check
      _
    $region3: #{autoencoder_forward.1} parent=1 // pred_check_branch
      %17 = sbr.rel (0) target = $region5
    $region4: #{autoencoder_forward.1} parent=1 // pred_region
      _
    $region5: #{autoencoder_forward.1} parent=1 // pred_fallthru
      _
    // Predicated region
    $region6: #{autoencoder_forward.1} parent=1 // pred_check
      _
    $region7: #{autoencoder_forward.1} parent=1 // pred_check_branch
      %19 = sbr.rel (0) target = $region9
    $region8: #{autoencoder_forward.1} parent=1 // pred_region
      _
    $region9: #{autoencoder_forward.1} parent=1 // pred_fallthru
      _
    // Predicated region
    $region10: #{autoencoder_forward.1} parent=1 // pred_check
      _
    $region11: #{autoencoder_forward.1} parent=1 // pred_check_branch
      %21 = sbr.rel (0) target = $region13
    $region12: #{autoencoder_forward.1} parent=1 // pred_region
      _
    $region13: #{autoencoder_forward.1} parent=1 // pred_fallthru
      _
    // Predicated region
    $region14: #{autoencoder_forward.1} parent=1 // pred_check
      _
    $region15: #{autoencoder_forward.1} parent=1 // pred_check_branch
      %23 = sbr.rel (0) target = $region17
    $region16: #{autoencoder_forward.1} parent=1 // pred_region
      %s25 = ssub.s32 1024, 1024
      %26 = vsyncadd [#allocation3], %s25
      %s27 = sshll.u32 [#allocation2], 4
      %s28 = int_to_ptr.vmem [resolvable:$true] %s27
      %33 = dma.hbm_to_vmem [thread:$0]  %s3, 1024, %s28, [#allocation3], 128, 128, 8
    $region17: #{autoencoder_forward.1} parent=1 // pred_fallthru
      _
    // Predicated region
    $region18: #{autoencoder_forward.1} parent=1 // pred_check
      _
    $region19: #{autoencoder_forward.1} parent=1 // pred_check_branch
      %35 = sbr.rel (0) target = $region21
    $region20: #{autoencoder_forward.1} parent=1 // pred_region
      _
    $region21: #{autoencoder_forward.1} parent=1 // pred_fallthru
      _
    // Predicated region
    $region22: #{autoencoder_forward.1} parent=1 // pred_check
      _
    $region23: #{autoencoder_forward.1} parent=1 // pred_check_branch
      %37 = sbr.rel (0) target = $region25
    $region24: #{autoencoder_forward.1} parent=1 // pred_region
      %s39 = ssub.s32 4096, 4096
      %40 = vsyncadd [#allocation5], %s39
      %s41 = sshll.u32 [#allocation4], 4
      %s42 = int_to_ptr.vmem [resolvable:$true] %s41
      %47 = dma.hbm_to_vmem [thread:$0]  %s5, 4096, %s42, [#allocation5], 256, 256, 16
    $region25: #{autoencoder_forward.1} parent=1 // pred_fallthru
      _
    // Predicated region
    $region26: #{autoencoder_forward.1} parent=1 // pred_check
      _
    $region27: #{autoencoder_forward.1} parent=1 // pred_check_branch
      %49 = sbr.rel (0) target = $region29
    $region28: #{autoencoder_forward.1} parent=1 // pred_region
      _
    $region29: #{autoencoder_forward.1} parent=1 // pred_fallthru
      _
    // Predicated region
    $region30: #{autoencoder_forward.1} parent=1 // pred_check
      _
    $region31: #{autoencoder_forward.1} parent=1 // pred_check_branch
      %51 = sbr.rel (0) target = $region33
    $region32: #{autoencoder_forward.1} parent=1 // pred_region
      _
    $region33: #{autoencoder_forward.1} parent=1 // pred_fallthru
      _
    // Predicated region
    $region34: #{autoencoder_forward.1} parent=1 // pred_check
      _
    $region35: #{autoencoder_forward.1} parent=1 // pred_check_branch
      %53 = sbr.rel (0) target = $region37
    $region36: #{autoencoder_forward.1} parent=1 // pred_region
      _
    $region37: #{autoencoder_forward.1} parent=1 // pred_fallthru
      _
    // Predicated region
    $region38: #{autoencoder_forward.1} parent=1 // pred_check
      _
    $region39: #{autoencoder_forward.1} parent=1 // pred_check_branch
      %55 = sbr.rel (0) target = $region41
    $region40: #{autoencoder_forward.1} parent=1 // pred_region
      %56 = dma.done [#allocation3], 1024
    $region41: #{autoencoder_forward.1} parent=1 // pred_fallthru
      _
    // Predicated region
    $region42: #{autoencoder_forward.1} parent=1 // pred_check
      _
    $region43: #{autoencoder_forward.1} parent=1 // pred_check_branch
      %58 = sbr.rel (0) target = $region45
    $region44: #{autoencoder_forward.1} parent=1 // pred_region
      %59 = dma.done [#allocation5], 4096
    $region45: #{autoencoder_forward.1} parent=1 // pred_fallthru
      _
    %v60 = vld [vmem:[%s0] sm:$0x3f]
    %v61 = vld [vmem:[%s1] sm:$0xff]
    %v62 = vld [vmem:[%s1 + $0x8] sm:$0xff]
    %v63 = vld [vmem:[%s1 + $0x10] sm:$0xff]
    %v64 = vld [vmem:[%s1 + $0x18] sm:$0xff]
    %v65 = vld [vmem:[%s1 + $0x20] sm:$0xff]
    %v66 = vld [vmem:[%s1 + $0x28] sm:$0xff]
    %v67 = vld [vmem:[%s1 + $0x30] sm:$0xff]
    %v68 = vld [vmem:[%s1 + $0x38] sm:$0xff]
    %v69 = vld [vmem:[%s1 + $0x40] sm:$0xff]
    %v70 = vld [vmem:[%s1 + $0x48] sm:$0xff]
    %v71 = vld [vmem:[%s1 + $0x50] sm:$0xff]
    %v72 = vld [vmem:[%s1 + $0x58] sm:$0xff]
    %v73 = vld [vmem:[%s1 + $0x60] sm:$0xff]
    %v74 = vld [vmem:[%s1 + $0x68] sm:$0xff]
    %v75 = vld [vmem:[%s1 + $0x70] sm:$0xff]
    %v76 = vld [vmem:[%s1 + $0x78] sm:$0xff]
    %v77 = vld [vmem:[%s1 + $0x80] sm:$0xff]
    %v78 = vld [vmem:[%s1 + $0x88] sm:$0xff]
    %v79 = vld [vmem:[%s1 + $0x90] sm:$0xff]
    %v80 = vld [vmem:[%s1 + $0x98] sm:$0xff]
    %v81 = vld [vmem:[%s1 + $0xa0] sm:$0xff]
    %v82 = vld [vmem:[%s1 + $0xa8] sm:$0xff]
    %v83 = vld [vmem:[%s1 + $0xb0] sm:$0xff]
    %v84 = vld [vmem:[%s1 + $0xb8] sm:$0xff]
    %v85 = vld [vmem:[%s1 + $0xc0] sm:$0xff]
    %v86 = vld [vmem:[%s1 + $0xc8] sm:$0xff]
    %v87 = vld [vmem:[%s1 + $0xd0] sm:$0xff]
    %v88 = vld [vmem:[%s1 + $0xd8] sm:$0xff]
    %v89 = vld [vmem:[%s1 + $0xe0] sm:$0xff]
    %v90 = vld [vmem:[%s1 + $0xe8] sm:$0xff]
    %v91 = vld [vmem:[%s1 + $0xf0] sm:$0xff]
    %v92 = vld [vmem:[%s1 + $0xf8] sm:$0xff]
    %v93 = vld [vmem:[%s1 + $0x100] sm:$0xff]
    %v94 = vld [vmem:[%s1 + $0x108] sm:$0xff]
    %v95 = vld [vmem:[%s1 + $0x110] sm:$0xff]
    %v96 = vld [vmem:[%s1 + $0x118] sm:$0xff]
    %v97 = vld [vmem:[%s1 + $0x120] sm:$0xff]
    %v98 = vld [vmem:[%s1 + $0x128] sm:$0xff]
    %v99 = vld [vmem:[%s1 + $0x130] sm:$0xff]
    %v100 = vld [vmem:[%s1 + $0x138] sm:$0xff]
    %v101 = vld [vmem:[%s1 + $0x140] sm:$0xff]
    %v102 = vld [vmem:[%s1 + $0x148] sm:$0xff]
    %v103 = vld [vmem:[%s1 + $0x150] sm:$0xff]
    %v104 = vld [vmem:[%s1 + $0x158] sm:$0xff]
    %v105 = vld [vmem:[%s1 + $0x160] sm:$0xff]
    %v106 = vld [vmem:[%s2] sm:$0x1]
    %v108 = vlaneseq
    %v109 = vshrl.u32 %v108, 7
    %v110 = vsub.s32 0, %v109
    %v111 = vrot.slane %v106, %v110
    %v114 = vcombine.high %v60, %v60
    %v116 = vunpack.c.l.s4 1983009808
    %v117 = vunpack.c.0.s8 %v116
    %v118 = vlaneseq
    %v119 = vshrl.u32 %v118, 7
    %v120 = vsub.s32 %v117, %v119
    %v121 = vrot.slane %v60, %v120
    %v123 = vunpack.c.l.s4 1983009808
    %v124 = vunpack.c.0.s8 %v123
    %v125 = vlaneseq
    %v126 = vshrl.u32 %v125, 7
    %v127 = vsub.s32 %v124, %v126
    %v128 = vrot.slane %v114, %v127
    %v129 = vcombine.high %v121, %v121
    %vm132 = vcmask 850944
    %v133 = vsel %vm132, %v128, 0
    %135 = vmatprep.subr.mxu0 0.0
    %136 = vmatpush1.msra.mxu0 %v76
    %137 = vmatprep.subr.mxu0 0.0
    %138 = vmatpush1.msra.mxu0 %v75
    %139 = vmatprep.subr.mxu0 0.0
    %140 = vmatpush1.msra.mxu0 %v74
    %141 = vmatprep.subr.mxu0 0.0
    %142 = vmatpush1.msra.mxu0 %v73
    %143 = vmatprep.subr.mxu0 0.0
    %144 = vmatpush1.msra.mxu0 %v72
    %145 = vmatprep.subr.mxu0 0.0
    %146 = vmatpush1.msra.mxu0 %v71
    %147 = vmatprep.subr.mxu0 0.0
    %148 = vmatpush1.msra.mxu0 %v70
    %149 = vmatprep.subr.mxu0 0.0
    %150 = vmatpush1.msra.mxu0 %v69
    %151 = vmatprep.subr.mxu0 0.0
    %152 = vmatpush1.msra.mxu0 %v68
    %153 = vmatprep.subr.mxu0 0.0
    %154 = vmatpush1.msra.mxu0 %v67
    %155 = vmatprep.subr.mxu0 0.0
    %156 = vmatpush1.msra.mxu0 %v66
    %157 = vmatprep.subr.mxu0 0.0
    %158 = vmatpush1.msra.mxu0 %v65
    %159 = vmatprep.subr.mxu0 0.0
    %160 = vmatpush1.msra.mxu0 %v64
    %161 = vmatprep.subr.mxu0 0.0
    %162 = vmatpush1.msra.mxu0 %v63
    %163 = vmatprep.subr.mxu0 0.0
    %164 = vmatpush1.msra.mxu0 %v62
    %165 = vmatprep.subr.mxu0 0.0
    %166 = vmatpush1.msra.mxu0 %v61
    %167 = vmatprep.subr.mxu0 0.0
    %168 = vmatpush2.msra.mxu0 %v92
    %169 = vmatprep.subr.mxu0 0.0
    %170 = vmatpush2.msra.mxu0 %v91
    %171 = vmatprep.subr.mxu0 0.0
    %172 = vmatpush2.msra.mxu0 %v90
    %173 = vmatprep.subr.mxu0 0.0
    %174 = vmatpush2.msra.mxu0 %v89
    %175 = vmatprep.subr.mxu0 0.0
    %176 = vmatpush2.msra.mxu0 %v88
    %177 = vmatprep.subr.mxu0 0.0
    %178 = vmatpush2.msra.mxu0 %v87
    %179 = vmatprep.subr.mxu0 0.0
    %180 = vmatpush2.msra.mxu0 %v86
    %181 = vmatprep.subr.mxu0 0.0
    %182 = vmatpush2.msra.mxu0 %v85
    %183 = vmatprep.subr.mxu0 0.0
    %184 = vmatpush2.msra.mxu0 %v84
    %185 = vmatprep.subr.mxu0 0.0
    %186 = vmatpush2.msra.mxu0 %v83
    %187 = vmatprep.subr.mxu0 0.0
    %188 = vmatpush2.msra.mxu0 %v82
    %189 = vmatprep.subr.mxu0 0.0
    %190 = vmatpush2.msra.mxu0 %v81
    %191 = vmatprep.subr.mxu0 0.0
    %192 = vmatpush2.msra.mxu0 %v80
    %193 = vmatprep.subr.mxu0 0.0
    %194 = vmatpush2.msra.mxu0 %v79
    %195 = vmatprep.subr.mxu0 0.0
    %196 = vmatpush2.msra.mxu0 %v78
    %197 = vmatprep.subr.mxu0 0.0
    %198 = vmatpush2.msra.mxu0 %v77
    %199 = vmatprep.mubr.f32.mxu0 %v129
    %200 = vmatmul.mubr.f32.gmra.mxu0 %v121
    %v201 = vpop.f32.mrf.mxu0
    %v202 = vadd.f32 %v111, %v201
    %v203 = vpop.f32.mrf.mxu0
    %204 = vdwg.mxu0
    %205 = vmatprep.subr.mxu0 0.0
    %206 = vmatpush1.msra.mxu0 0.0
    %207 = vmatprep.subr.mxu0 0.0
    %208 = vmatpush1.msra.mxu0 0.0
    %209 = vmatprep.subr.mxu0 0.0
    %210 = vmatpush1.msra.mxu0 0.0
    %211 = vmatprep.subr.mxu0 0.0
    %212 = vmatpush1.msra.mxu0 %v105
    %213 = vmatprep.subr.mxu0 0.0
    %214 = vmatpush1.msra.mxu0 %v104
    %215 = vmatprep.subr.mxu0 0.0
    %216 = vmatpush1.msra.mxu0 %v103
    %217 = vmatprep.subr.mxu0 0.0
    %218 = vmatpush1.msra.mxu0 %v102
    %219 = vmatprep.subr.mxu0 0.0
    %220 = vmatpush1.msra.mxu0 %v101
    %221 = vmatprep.subr.mxu0 0.0
    %222 = vmatpush1.msra.mxu0 %v100
    %223 = vmatprep.subr.mxu0 0.0
    %224 = vmatpush1.msra.mxu0 %v99
    %225 = vmatprep.subr.mxu0 0.0
    %226 = vmatpush1.msra.mxu0 %v98
    %227 = vmatprep.subr.mxu0 0.0
    %228 = vmatpush1.msra.mxu0 %v97
    %229 = vmatprep.subr.mxu0 0.0
    %230 = vmatpush1.msra.mxu0 %v96
    %231 = vmatprep.subr.mxu0 0.0
    %232 = vmatpush1.msra.mxu0 %v95
    %233 = vmatprep.subr.mxu0 0.0
    %234 = vmatpush1.msra.mxu0 %v94
    %235 = vmatprep.subr.mxu0 0.0
    %236 = vmatpush1.msra.mxu0 %v93
    %237 = vmatprep.subr.mxu0 0.0
    %238 = vmatpush2.msra.mxu0 0.0
    %239 = vmatprep.subr.mxu0 0.0
    %240 = vmatpush2.msra.mxu0 0.0
    %241 = vmatprep.subr.mxu0 0.0
    %242 = vmatpush2.msra.mxu0 0.0
    %243 = vmatprep.subr.mxu0 0.0
    %244 = vmatpush2.msra.mxu0 0.0
    %245 = vmatprep.subr.mxu0 0.0
    %246 = vmatpush2.msra.mxu0 0.0
    %247 = vmatprep.subr.mxu0 0.0
    %248 = vmatpush2.msra.mxu0 0.0
    %249 = vmatprep.subr.mxu0 0.0
    %250 = vmatpush2.msra.mxu0 0.0
    %251 = vmatprep.subr.mxu0 0.0
    %252 = vmatpush2.msra.mxu0 0.0
    %253 = vmatprep.subr.mxu0 0.0
    %254 = vmatpush2.msra.mxu0 0.0
    %255 = vmatprep.subr.mxu0 0.0
    %256 = vmatpush2.msra.mxu0 0.0
    %257 = vmatprep.subr.mxu0 0.0
    %258 = vmatpush2.msra.mxu0 0.0
    %259 = vmatprep.subr.mxu0 0.0
    %260 = vmatpush2.msra.mxu0 0.0
    %261 = vmatprep.subr.mxu0 0.0
    %262 = vmatpush2.msra.mxu0 0.0
    %263 = vmatprep.subr.mxu0 0.0
    %264 = vmatpush2.msra.mxu0 0.0
    %265 = vmatprep.subr.mxu0 0.0
    %266 = vmatpush2.msra.mxu0 0.0
    %267 = vmatprep.subr.mxu0 0.0
    %268 = vmatpush2.msra.mxu0 0.0
    %269 = vmatprep.mubr.f32.mxu0 0.0
    %270 = vmatmul.mubr.f32.gmra.mxu0 %v133
    %v271 = vpop.f32.mrf.mxu0
    %v272 = vadd.f32 %v202, %v271
    %v273 = vpop.f32.mrf.mxu0
    %274 = vdwg.mxu0
    %v275 = vld [vmem:[#allocation2] sm:$0xff]
    %v276 = vld [vmem:[#allocation2 + $0x8] sm:$0xff]
    %v277 = vld [vmem:[#allocation2 + $0x10] sm:$0xff]
    %v278 = vld [vmem:[#allocation2 + $0x18] sm:$0xff]
    %v279 = vld [vmem:[#allocation2 + $0x20] sm:$0xff]
    %v280 = vld [vmem:[#allocation2 + $0x28] sm:$0xff]
    %v281 = vld [vmem:[#allocation2 + $0x30] sm:$0xff]
    %v282 = vld [vmem:[#allocation2 + $0x38] sm:$0xff]
    %v283 = vld [vmem:[%s4] sm:$0x1]
    %v285 = vlaneseq
    %v286 = vshrl.u32 %v285, 7
    %v287 = vsub.s32 0, %v286
    %v288 = vrot.slane %v283, %v287
    %vm290 = vcmask 523264
    %v292 = vsel %vm290, %v272, 0
    %294 = vmatprep.subr.mxu0 0.0
    %295 = vmatpush1.msra.mxu0 0.0
    %296 = vmatprep.subr.mxu0 0.0
    %297 = vmatpush1.msra.mxu0 0.0
    %298 = vmatprep.subr.mxu0 0.0
    %299 = vmatpush1.msra.mxu0 0.0
    %300 = vmatprep.subr.mxu0 0.0
    %301 = vmatpush1.msra.mxu0 0.0
    %302 = vmatprep.subr.mxu0 0.0
    %303 = vmatpush1.msra.mxu0 0.0
    %304 = vmatprep.subr.mxu0 0.0
    %305 = vmatpush1.msra.mxu0 0.0
    %306 = vmatprep.subr.mxu0 0.0
    %307 = vmatpush1.msra.mxu0 0.0
    %308 = vmatprep.subr.mxu0 0.0
    %309 = vmatpush1.msra.mxu0 0.0
    %310 = vmatprep.subr.mxu0 0.0
    %311 = vmatpush1.msra.mxu0 %v282
    %312 = vmatprep.subr.mxu0 0.0
    %313 = vmatpush1.msra.mxu0 %v281
    %314 = vmatprep.subr.mxu0 0.0
    %315 = vmatpush1.msra.mxu0 %v280
    %316 = vmatprep.subr.mxu0 0.0
    %317 = vmatpush1.msra.mxu0 %v279
    %318 = vmatprep.subr.mxu0 0.0
    %319 = vmatpush1.msra.mxu0 %v278
    %320 = vmatprep.subr.mxu0 0.0
    %321 = vmatpush1.msra.mxu0 %v277
    %322 = vmatprep.subr.mxu0 0.0
    %323 = vmatpush1.msra.mxu0 %v276
    %324 = vmatprep.subr.mxu0 0.0
    %325 = vmatpush1.msra.mxu0 %v275
    %326 = vmatprep.subr.mxu0 0.0
    %327 = vmatpush2.msra.mxu0 0.0
    %328 = vmatprep.subr.mxu0 0.0
    %329 = vmatpush2.msra.mxu0 0.0
    %330 = vmatprep.subr.mxu0 0.0
    %331 = vmatpush2.msra.mxu0 0.0
    %332 = vmatprep.subr.mxu0 0.0
    %333 = vmatpush2.msra.mxu0 0.0
    %334 = vmatprep.subr.mxu0 0.0
    %335 = vmatpush2.msra.mxu0 0.0
    %336 = vmatprep.subr.mxu0 0.0
    %337 = vmatpush2.msra.mxu0 0.0
    %338 = vmatprep.subr.mxu0 0.0
    %339 = vmatpush2.msra.mxu0 0.0
    %340 = vmatprep.subr.mxu0 0.0
    %341 = vmatpush2.msra.mxu0 0.0
    %342 = vmatprep.subr.mxu0 0.0
    %343 = vmatpush2.msra.mxu0 0.0
    %344 = vmatprep.subr.mxu0 0.0
    %345 = vmatpush2.msra.mxu0 0.0
    %346 = vmatprep.subr.mxu0 0.0
    %347 = vmatpush2.msra.mxu0 0.0
    %348 = vmatprep.subr.mxu0 0.0
    %349 = vmatpush2.msra.mxu0 0.0
    %350 = vmatprep.subr.mxu0 0.0
    %351 = vmatpush2.msra.mxu0 0.0
    %352 = vmatprep.subr.mxu0 0.0
    %353 = vmatpush2.msra.mxu0 0.0
    %354 = vmatprep.subr.mxu0 0.0
    %355 = vmatpush2.msra.mxu0 0.0
    %356 = vmatprep.subr.mxu0 0.0
    %357 = vmatpush2.msra.mxu0 0.0
    %358 = vmatprep.mubr.f32.mxu0 0.0
    %359 = vmatmul.mubr.f32.gmra.mxu0 %v292
    %v360 = vpop.f32.mrf.mxu0
    %v361 = vadd.f32 %v288, %v360
    %v362 = vpop.f32.mrf.mxu0
    %363 = vdwg.mxu0
    %v364 = vmax.f32 %v361, 0.0
    %v365 = vld [vmem:[#allocation4] sm:$0xff]
    %v366 = vld [vmem:[#allocation4 + $0x8] sm:$0xff]
    %v367 = vld [vmem:[#allocation4 + $0x10] sm:$0xff]
    %v368 = vld [vmem:[#allocation4 + $0x18] sm:$0xff]
    %v369 = vld [vmem:[#allocation4 + $0x20] sm:$0xff]
    %v370 = vld [vmem:[#allocation4 + $0x28] sm:$0xff]
    %v371 = vld [vmem:[#allocation4 + $0x30] sm:$0xff]
    %v372 = vld [vmem:[#allocation4 + $0x38] sm:$0xff]
    %v373 = vld [vmem:[#allocation4 + $0x40] sm:$0xff]
    %v374 = vld [vmem:[#allocation4 + $0x48] sm:$0xff]
    %v375 = vld [vmem:[#allocation4 + $0x50] sm:$0xff]
    %v376 = vld [vmem:[#allocation4 + $0x58] sm:$0xff]
    %v377 = vld [vmem:[#allocation4 + $0x60] sm:$0xff]
    %v378 = vld [vmem:[#allocation4 + $0x68] sm:$0xff]
    %v379 = vld [vmem:[#allocation4 + $0x70] sm:$0xff]
    %v380 = vld [vmem:[#allocation4 + $0x78] sm:$0xff]
    %v381 = vld [vmem:[#allocation4 + $0x80] sm:$0xff]
    %v382 = vld [vmem:[#allocation4 + $0x88] sm:$0xff]
    %v383 = vld [vmem:[#allocation4 + $0x90] sm:$0xff]
    %v384 = vld [vmem:[#allocation4 + $0x98] sm:$0xff]
    %v385 = vld [vmem:[#allocation4 + $0xa0] sm:$0xff]
    %v386 = vld [vmem:[#allocation4 + $0xa8] sm:$0xff]
    %v387 = vld [vmem:[#allocation4 + $0xb0] sm:$0xff]
    %v388 = vld [vmem:[#allocation4 + $0xb8] sm:$0xff]
    %v389 = vld [vmem:[#allocation4 + $0xc0] sm:$0xff]
    %v390 = vld [vmem:[#allocation4 + $0xc8] sm:$0xff]
    %v391 = vld [vmem:[#allocation4 + $0xd0] sm:$0xff]
    %v392 = vld [vmem:[#allocation4 + $0xd8] sm:$0xff]
    %v393 = vld [vmem:[#allocation4 + $0xe0] sm:$0xff]
    %v394 = vld [vmem:[#allocation4 + $0xe8] sm:$0xff]
    %v395 = vld [vmem:[#allocation4 + $0xf0] sm:$0xff]
    %v396 = vld [vmem:[#allocation4 + $0xf8] sm:$0xff]
    %v397 = vld [vmem:[%s6] sm:$0x3]
    %v399 = vlaneseq
    %v400 = vshrl.u32 %v399, 7
    %v401 = vsub.s32 0, %v400
    %v402 = vrot.slane %v397, %v401
    %v403 = vlaneseq
    %v404 = vshrl.u32 %v403, 7
    %v405 = vsub.s32 1, %v404
    %v406 = vrot.slane %v397, %v405
    %409 = vmatprep.subr.mxu0 %v396
    %410 = vmatpush1.msra.mxu0 %v395
    %411 = vmatprep.subr.mxu0 %v394
    %412 = vmatpush1.msra.mxu0 %v393
    %413 = vmatprep.subr.mxu0 %v392
    %414 = vmatpush1.msra.mxu0 %v391
    %415 = vmatprep.subr.mxu0 %v390
    %416 = vmatpush1.msra.mxu0 %v389
    %417 = vmatprep.subr.mxu0 %v388
    %418 = vmatpush1.msra.mxu0 %v387
    %419 = vmatprep.subr.mxu0 %v386
    %420 = vmatpush1.msra.mxu0 %v385
    %421 = vmatprep.subr.mxu0 %v384
    %422 = vmatpush1.msra.mxu0 %v383
    %423 = vmatprep.subr.mxu0 %v382
    %424 = vmatpush1.msra.mxu0 %v381
    %425 = vmatprep.subr.mxu0 %v380
    %426 = vmatpush1.msra.mxu0 %v379
    %427 = vmatprep.subr.mxu0 %v378
    %428 = vmatpush1.msra.mxu0 %v377
    %429 = vmatprep.subr.mxu0 %v376
    %430 = vmatpush1.msra.mxu0 %v375
    %431 = vmatprep.subr.mxu0 %v374
    %432 = vmatpush1.msra.mxu0 %v373
    %433 = vmatprep.subr.mxu0 %v372
    %434 = vmatpush1.msra.mxu0 %v371
    %435 = vmatprep.subr.mxu0 %v370
    %436 = vmatpush1.msra.mxu0 %v369
    %437 = vmatprep.subr.mxu0 %v368
    %438 = vmatpush1.msra.mxu0 %v367
    %439 = vmatprep.subr.mxu0 %v366
    %440 = vmatpush1.msra.mxu0 %v365
    %441 = vmatprep.subr.mxu0 0.0
    %442 = vmatpush2.msra.mxu0 0.0
    %443 = vmatprep.subr.mxu0 0.0
    %444 = vmatpush2.msra.mxu0 0.0
    %445 = vmatprep.subr.mxu0 0.0
    %446 = vmatpush2.msra.mxu0 0.0
    %447 = vmatprep.subr.mxu0 0.0
    %448 = vmatpush2.msra.mxu0 0.0
    %449 = vmatprep.subr.mxu0 0.0
    %450 = vmatpush2.msra.mxu0 0.0
    %451 = vmatprep.subr.mxu0 0.0
    %452 = vmatpush2.msra.mxu0 0.0
    %453 = vmatprep.subr.mxu0 0.0
    %454 = vmatpush2.msra.mxu0 0.0
    %455 = vmatprep.subr.mxu0 0.0
    %456 = vmatpush2.msra.mxu0 0.0
    %457 = vmatprep.subr.mxu0 0.0
    %458 = vmatpush2.msra.mxu0 0.0
    %459 = vmatprep.subr.mxu0 0.0
    %460 = vmatpush2.msra.mxu0 0.0
    %461 = vmatprep.subr.mxu0 0.0
    %462 = vmatpush2.msra.mxu0 0.0
    %463 = vmatprep.subr.mxu0 0.0
    %464 = vmatpush2.msra.mxu0 0.0
    %465 = vmatprep.subr.mxu0 0.0
    %466 = vmatpush2.msra.mxu0 0.0
    %467 = vmatprep.subr.mxu0 0.0
    %468 = vmatpush2.msra.mxu0 0.0
    %469 = vmatprep.subr.mxu0 0.0
    %470 = vmatpush2.msra.mxu0 0.0
    %471 = vmatprep.subr.mxu0 0.0
    %472 = vmatpush2.msra.mxu0 0.0
    %473 = vmatprep.mubr.f32.mxu0 0.0
    %474 = vmatmul.mubr.f32.gmra.mxu0 %v364
    %v475 = vpop.f32.mrf.mxu0
    %v476 = vadd.f32 %v402, %v475
    %v477 = vpop.f32.mrf.mxu0
    %v478 = vadd.f32 %v406, %v477
    %479 = vdwg.mxu0
    %v480 = vmax.f32 %v476, 0.0
    %v481 = vmax.f32 %v478, 0.0
    %v482 = vld [vmem:[%s7] sm:$0xff]
    %v483 = vld [vmem:[%s7 + $0x8] sm:$0xff]
    %v484 = vld [vmem:[%s7 + $0x10] sm:$0xff]
    %v485 = vld [vmem:[%s7 + $0x18] sm:$0xff]
    %v486 = vld [vmem:[%s7 + $0x20] sm:$0xff]
    %v487 = vld [vmem:[%s7 + $0x28] sm:$0xff]
    %v488 = vld [vmem:[%s7 + $0x30] sm:$0xff]
    %v489 = vld [vmem:[%s7 + $0x38] sm:$0xff]
    %v490 = vld [vmem:[%s7 + $0x40] sm:$0xff]
    %v491 = vld [vmem:[%s7 + $0x48] sm:$0xff]
    %v492 = vld [vmem:[%s7 + $0x50] sm:$0xff]
    %v493 = vld [vmem:[%s7 + $0x58] sm:$0xff]
    %v494 = vld [vmem:[%s7 + $0x60] sm:$0xff]
    %v495 = vld [vmem:[%s7 + $0x68] sm:$0xff]
    %v496 = vld [vmem:[%s7 + $0x70] sm:$0xff]
    %v497 = vld [vmem:[%s7 + $0x78] sm:$0xff]
    %v498 = vld [vmem:[%s7 + $0x80] sm:$0xff]
    %v499 = vld [vmem:[%s7 + $0x88] sm:$0xff]
    %v500 = vld [vmem:[%s7 + $0x90] sm:$0xff]
    %v501 = vld [vmem:[%s7 + $0x98] sm:$0xff]
    %v502 = vld [vmem:[%s7 + $0xa0] sm:$0xff]
    %v503 = vld [vmem:[%s7 + $0xa8] sm:$0xff]
    %v504 = vld [vmem:[%s7 + $0xb0] sm:$0xff]
    %v505 = vld [vmem:[%s7 + $0xb8] sm:$0xff]
    %v507 = vsel %vm290, %v480, 0
    %509 = vmatprep.subr.mxu0 0.0
    %510 = vmatpush1.msra.mxu0 0.0
    %511 = vmatprep.subr.mxu0 0.0
    %512 = vmatpush1.msra.mxu0 0.0
    %513 = vmatprep.subr.mxu0 0.0
    %514 = vmatpush1.msra.mxu0 0.0
    %515 = vmatprep.subr.mxu0 0.0
    %516 = vmatpush1.msra.mxu0 0.0
    %517 = vmatprep.subr.mxu0 0.0
    %518 = vmatpush1.msra.mxu0 0.0
    %519 = vmatprep.subr.mxu0 0.0
    %520 = vmatpush1.msra.mxu0 0.0
    %521 = vmatprep.subr.mxu0 0.0
    %522 = vmatpush1.msra.mxu0 0.0
    %523 = vmatprep.subr.mxu0 0.0
    %524 = vmatpush1.msra.mxu0 0.0
    %525 = vmatprep.subr.mxu0 %v504
    %526 = vmatpush1.msra.mxu0 %v503
    %527 = vmatprep.subr.mxu0 %v501
    %528 = vmatpush1.msra.mxu0 %v500
    %529 = vmatprep.subr.mxu0 %v498
    %530 = vmatpush1.msra.mxu0 %v497
    %531 = vmatprep.subr.mxu0 %v495
    %532 = vmatpush1.msra.mxu0 %v494
    %533 = vmatprep.subr.mxu0 %v492
    %534 = vmatpush1.msra.mxu0 %v491
    %535 = vmatprep.subr.mxu0 %v489
    %536 = vmatpush1.msra.mxu0 %v488
    %537 = vmatprep.subr.mxu0 %v486
    %538 = vmatpush1.msra.mxu0 %v485
    %539 = vmatprep.subr.mxu0 %v483
    %540 = vmatpush1.msra.mxu0 %v482
    %541 = vmatprep.subr.mxu0 0.0
    %542 = vmatpush2.msra.mxu0 0.0
    %543 = vmatprep.subr.mxu0 0.0
    %544 = vmatpush2.msra.mxu0 0.0
    %545 = vmatprep.subr.mxu0 0.0
    %546 = vmatpush2.msra.mxu0 0.0
    %547 = vmatprep.subr.mxu0 0.0
    %548 = vmatpush2.msra.mxu0 0.0
    %549 = vmatprep.subr.mxu0 0.0
    %550 = vmatpush2.msra.mxu0 0.0
    %551 = vmatprep.subr.mxu0 0.0
    %552 = vmatpush2.msra.mxu0 0.0
    %553 = vmatprep.subr.mxu0 0.0
    %554 = vmatpush2.msra.mxu0 0.0
    %555 = vmatprep.subr.mxu0 0.0
    %556 = vmatpush2.msra.mxu0 0.0
    %557 = vmatprep.subr.mxu0 0.0
    %558 = vmatpush2.msra.mxu0 0.0
    %559 = vmatprep.subr.mxu0 0.0
    %560 = vmatpush2.msra.mxu0 0.0
    %561 = vmatprep.subr.mxu0 0.0
    %562 = vmatpush2.msra.mxu0 0.0
    %563 = vmatprep.subr.mxu0 0.0
    %564 = vmatpush2.msra.mxu0 0.0
    %565 = vmatprep.subr.mxu0 0.0
    %566 = vmatpush2.msra.mxu0 0.0
    %567 = vmatprep.subr.mxu0 0.0
    %568 = vmatpush2.msra.mxu0 0.0
    %569 = vmatprep.subr.mxu0 0.0
    %570 = vmatpush2.msra.mxu0 0.0
    %571 = vmatprep.subr.mxu0 0.0
    %572 = vmatpush2.msra.mxu0 0.0
    %573 = vmatprep.mubr.f32.mxu0 0.0
    %574 = vmatmul.mubr.f32.gmra.mxu0 %v507
    %v575 = vpop.f32.mrf.mxu0
    %v576 = vadd.f32 0.0, %v575
    %v577 = vpop.f32.mrf.mxu0
    %v578 = vadd.f32 0.0, %v577
    %579 = vdwg.mxu0
    %580 = vmatprep.subr.mxu0 0.0
    %581 = vmatpush1.msra.mxu0 0.0
    %582 = vmatprep.subr.mxu0 0.0
    %583 = vmatpush1.msra.mxu0 0.0
    %584 = vmatprep.subr.mxu0 0.0
    %585 = vmatpush1.msra.mxu0 0.0
    %586 = vmatprep.subr.mxu0 0.0
    %587 = vmatpush1.msra.mxu0 0.0
    %588 = vmatprep.subr.mxu0 0.0
    %589 = vmatpush1.msra.mxu0 0.0
    %590 = vmatprep.subr.mxu0 0.0
    %591 = vmatpush1.msra.mxu0 0.0
    %592 = vmatprep.subr.mxu0 0.0
    %593 = vmatpush1.msra.mxu0 0.0
    %594 = vmatprep.subr.mxu0 0.0
    %595 = vmatpush1.msra.mxu0 0.0
    %596 = vmatprep.subr.mxu0 0.0
    %597 = vmatpush1.msra.mxu0 %v505
    %598 = vmatprep.subr.mxu0 0.0
    %599 = vmatpush1.msra.mxu0 %v502
    %600 = vmatprep.subr.mxu0 0.0
    %601 = vmatpush1.msra.mxu0 %v499
    %602 = vmatprep.subr.mxu0 0.0
    %603 = vmatpush1.msra.mxu0 %v496
    %604 = vmatprep.subr.mxu0 0.0
    %605 = vmatpush1.msra.mxu0 %v493
    %606 = vmatprep.subr.mxu0 0.0
    %607 = vmatpush1.msra.mxu0 %v490
    %608 = vmatprep.subr.mxu0 0.0
    %609 = vmatpush1.msra.mxu0 %v487
    %610 = vmatprep.subr.mxu0 0.0
    %611 = vmatpush1.msra.mxu0 %v484
    %612 = vmatprep.subr.mxu0 0.0
    %613 = vmatpush2.msra.mxu0 0.0
    %614 = vmatprep.subr.mxu0 0.0
    %615 = vmatpush2.msra.mxu0 0.0
    %616 = vmatprep.subr.mxu0 0.0
    %617 = vmatpush2.msra.mxu0 0.0
    %618 = vmatprep.subr.mxu0 0.0
    %619 = vmatpush2.msra.mxu0 0.0
    %620 = vmatprep.subr.mxu0 0.0
    %621 = vmatpush2.msra.mxu0 0.0
    %622 = vmatprep.subr.mxu0 0.0
    %623 = vmatpush2.msra.mxu0 0.0
    %624 = vmatprep.subr.mxu0 0.0
    %625 = vmatpush2.msra.mxu0 0.0
    %626 = vmatprep.subr.mxu0 0.0
    %627 = vmatpush2.msra.mxu0 0.0
    %628 = vmatprep.subr.mxu0 0.0
    %629 = vmatpush2.msra.mxu0 0.0
    %630 = vmatprep.subr.mxu0 0.0
    %631 = vmatpush2.msra.mxu0 0.0
    %632 = vmatprep.subr.mxu0 0.0
    %633 = vmatpush2.msra.mxu0 0.0
    %634 = vmatprep.subr.mxu0 0.0
    %635 = vmatpush2.msra.mxu0 0.0
    %636 = vmatprep.subr.mxu0 0.0
    %637 = vmatpush2.msra.mxu0 0.0
    %638 = vmatprep.subr.mxu0 0.0
    %639 = vmatpush2.msra.mxu0 0.0
    %640 = vmatprep.subr.mxu0 0.0
    %641 = vmatpush2.msra.mxu0 0.0
    %642 = vmatprep.subr.mxu0 0.0
    %643 = vmatpush2.msra.mxu0 0.0
    %644 = vmatprep.mubr.f32.mxu0 0.0
    %645 = vmatmul.mubr.f32.gmra.mxu0 %v507
    %v646 = vpop.f32.mrf.mxu0
    %v647 = vadd.f32 0.0, %v646
    %v648 = vpop.f32.mrf.mxu0
    %649 = vdwg.mxu0
    %s650 = scalar_lea.vmem %s7, 192
    %v651 = vld [vmem:[%s650] sm:$0xff]
    %v652 = vld [vmem:[%s650 + $0x8] sm:$0xff]
    %v653 = vld [vmem:[%s650 + $0x10] sm:$0xff]
    %v654 = vld [vmem:[%s650 + $0x18] sm:$0xff]
    %v655 = vld [vmem:[%s650 + $0x20] sm:$0xff]
    %v656 = vld [vmem:[%s650 + $0x28] sm:$0xff]
    %v657 = vld [vmem:[%s650 + $0x30] sm:$0xff]
    %v658 = vld [vmem:[%s650 + $0x38] sm:$0xff]
    %v659 = vld [vmem:[%s650 + $0x40] sm:$0xff]
    %v660 = vld [vmem:[%s650 + $0x48] sm:$0xff]
    %v661 = vld [vmem:[%s650 + $0x50] sm:$0xff]
    %v662 = vld [vmem:[%s650 + $0x58] sm:$0xff]
    %v663 = vld [vmem:[%s650 + $0x60] sm:$0xff]
    %v664 = vld [vmem:[%s650 + $0x68] sm:$0xff]
    %v665 = vld [vmem:[%s650 + $0x70] sm:$0xff]
    %v666 = vld [vmem:[%s650 + $0x78] sm:$0xff]
    %v667 = vld [vmem:[%s650 + $0x80] sm:$0xff]
    %v668 = vld [vmem:[%s650 + $0x88] sm:$0xff]
    %v669 = vld [vmem:[%s650 + $0x90] sm:$0xff]
    %v670 = vld [vmem:[%s650 + $0x98] sm:$0xff]
    %v671 = vld [vmem:[%s650 + $0xa0] sm:$0xff]
    %v672 = vld [vmem:[%s650 + $0xa8] sm:$0xff]
    %v673 = vld [vmem:[%s650 + $0xb0] sm:$0xff]
    %v674 = vld [vmem:[%s650 + $0xb8] sm:$0xff]
    %675 = vrot.lane.b32.xlu0 %v480, 64
    %v676 = vpop.permute.xlu0 %675
    %v677 = vsel %vm290, %v676, 0
    %679 = vmatprep.subr.mxu0 0.0
    %680 = vmatpush1.msra.mxu0 0.0
    %681 = vmatprep.subr.mxu0 0.0
    %682 = vmatpush1.msra.mxu0 0.0
    %683 = vmatprep.subr.mxu0 0.0
    %684 = vmatpush1.msra.mxu0 0.0
    %685 = vmatprep.subr.mxu0 0.0
    %686 = vmatpush1.msra.mxu0 0.0
    %687 = vmatprep.subr.mxu0 0.0
    %688 = vmatpush1.msra.mxu0 0.0
    %689 = vmatprep.subr.mxu0 0.0
    %690 = vmatpush1.msra.mxu0 0.0
    %691 = vmatprep.subr.mxu0 0.0
    %692 = vmatpush1.msra.mxu0 0.0
    %693 = vmatprep.subr.mxu0 0.0
    %694 = vmatpush1.msra.mxu0 0.0
    %695 = vmatprep.subr.mxu0 %v673
    %696 = vmatpush1.msra.mxu0 %v672
    %697 = vmatprep.subr.mxu0 %v670
    %698 = vmatpush1.msra.mxu0 %v669
    %699 = vmatprep.subr.mxu0 %v667
    %700 = vmatpush1.msra.mxu0 %v666
    %701 = vmatprep.subr.mxu0 %v664
    %702 = vmatpush1.msra.mxu0 %v663
    %703 = vmatprep.subr.mxu0 %v661
    %704 = vmatpush1.msra.mxu0 %v660
    %705 = vmatprep.subr.mxu0 %v658
    %706 = vmatpush1.msra.mxu0 %v657
    %707 = vmatprep.subr.mxu0 %v655
    %708 = vmatpush1.msra.mxu0 %v654
    %709 = vmatprep.subr.mxu0 %v652
    %710 = vmatpush1.msra.mxu0 %v651
    %711 = vmatprep.subr.mxu0 0.0
    %712 = vmatpush2.msra.mxu0 0.0
    %713 = vmatprep.subr.mxu0 0.0
    %714 = vmatpush2.msra.mxu0 0.0
    %715 = vmatprep.subr.mxu0 0.0
    %716 = vmatpush2.msra.mxu0 0.0
    %717 = vmatprep.subr.mxu0 0.0
    %718 = vmatpush2.msra.mxu0 0.0
    %719 = vmatprep.subr.mxu0 0.0
    %720 = vmatpush2.msra.mxu0 0.0
    %721 = vmatprep.subr.mxu0 0.0
    %722 = vmatpush2.msra.mxu0 0.0
    %723 = vmatprep.subr.mxu0 0.0
    %724 = vmatpush2.msra.mxu0 0.0
    %725 = vmatprep.subr.mxu0 0.0
    %726 = vmatpush2.msra.mxu0 0.0
    %727 = vmatprep.subr.mxu0 0.0
    %728 = vmatpush2.msra.mxu0 0.0
    %729 = vmatprep.subr.mxu0 0.0
    %730 = vmatpush2.msra.mxu0 0.0
    %731 = vmatprep.subr.mxu0 0.0
    %732 = vmatpush2.msra.mxu0 0.0
    %733 = vmatprep.subr.mxu0 0.0
    %734 = vmatpush2.msra.mxu0 0.0
    %735 = vmatprep.subr.mxu0 0.0
    %736 = vmatpush2.msra.mxu0 0.0
    %737 = vmatprep.subr.mxu0 0.0
    %738 = vmatpush2.msra.mxu0 0.0
    %739 = vmatprep.subr.mxu0 0.0
    %740 = vmatpush2.msra.mxu0 0.0
    %741 = vmatprep.subr.mxu0 0.0
    %742 = vmatpush2.msra.mxu0 0.0
    %743 = vmatprep.mubr.f32.mxu0 0.0
    %744 = vmatmul.mubr.f32.gmra.mxu0 %v677
    %v745 = vpop.f32.mrf.mxu0
    %v746 = vadd.f32 0.0, %v745
    %v747 = vpop.f32.mrf.mxu0
    %v748 = vadd.f32 0.0, %v747
    %749 = vdwg.mxu0
    %750 = vmatprep.subr.mxu0 0.0
    %751 = vmatpush1.msra.mxu0 0.0
    %752 = vmatprep.subr.mxu0 0.0
    %753 = vmatpush1.msra.mxu0 0.0
    %754 = vmatprep.subr.mxu0 0.0
    %755 = vmatpush1.msra.mxu0 0.0
    %756 = vmatprep.subr.mxu0 0.0
    %757 = vmatpush1.msra.mxu0 0.0
    %758 = vmatprep.subr.mxu0 0.0
    %759 = vmatpush1.msra.mxu0 0.0
    %760 = vmatprep.subr.mxu0 0.0
    %761 = vmatpush1.msra.mxu0 0.0
    %762 = vmatprep.subr.mxu0 0.0
    %763 = vmatpush1.msra.mxu0 0.0
    %764 = vmatprep.subr.mxu0 0.0
    %765 = vmatpush1.msra.mxu0 0.0
    %766 = vmatprep.subr.mxu0 0.0
    %767 = vmatpush1.msra.mxu0 %v674
    %768 = vmatprep.subr.mxu0 0.0
    %769 = vmatpush1.msra.mxu0 %v671
    %770 = vmatprep.subr.mxu0 0.0
    %771 = vmatpush1.msra.mxu0 %v668
    %772 = vmatprep.subr.mxu0 0.0
    %773 = vmatpush1.msra.mxu0 %v665
    %774 = vmatprep.subr.mxu0 0.0
    %775 = vmatpush1.msra.mxu0 %v662
    %776 = vmatprep.subr.mxu0 0.0
    %777 = vmatpush1.msra.mxu0 %v659
    %778 = vmatprep.subr.mxu0 0.0
    %779 = vmatpush1.msra.mxu0 %v656
    %780 = vmatprep.subr.mxu0 0.0
    %781 = vmatpush1.msra.mxu0 %v653
    %782 = vmatprep.subr.mxu0 0.0
    %783 = vmatpush2.msra.mxu0 0.0
    %784 = vmatprep.subr.mxu0 0.0
    %785 = vmatpush2.msra.mxu0 0.0
    %786 = vmatprep.subr.mxu0 0.0
    %787 = vmatpush2.msra.mxu0 0.0
    %788 = vmatprep.subr.mxu0 0.0
    %789 = vmatpush2.msra.mxu0 0.0
    %790 = vmatprep.subr.mxu0 0.0
    %791 = vmatpush2.msra.mxu0 0.0
    %792 = vmatprep.subr.mxu0 0.0
    %793 = vmatpush2.msra.mxu0 0.0
    %794 = vmatprep.subr.mxu0 0.0
    %795 = vmatpush2.msra.mxu0 0.0
    %796 = vmatprep.subr.mxu0 0.0
    %797 = vmatpush2.msra.mxu0 0.0
    %798 = vmatprep.subr.mxu0 0.0
    %799 = vmatpush2.msra.mxu0 0.0
    %800 = vmatprep.subr.mxu0 0.0
    %801 = vmatpush2.msra.mxu0 0.0
    %802 = vmatprep.subr.mxu0 0.0
    %803 = vmatpush2.msra.mxu0 0.0
    %804 = vmatprep.subr.mxu0 0.0
    %805 = vmatpush2.msra.mxu0 0.0
    %806 = vmatprep.subr.mxu0 0.0
    %807 = vmatpush2.msra.mxu0 0.0
    %808 = vmatprep.subr.mxu0 0.0
    %809 = vmatpush2.msra.mxu0 0.0
    %810 = vmatprep.subr.mxu0 0.0
    %811 = vmatpush2.msra.mxu0 0.0
    %812 = vmatprep.subr.mxu0 0.0
    %813 = vmatpush2.msra.mxu0 0.0
    %814 = vmatprep.mubr.f32.mxu0 0.0
    %815 = vmatmul.mubr.f32.gmra.mxu0 %v677
    %v816 = vpop.f32.mrf.mxu0
    %v817 = vadd.f32 0.0, %v816
    %v818 = vpop.f32.mrf.mxu0
    %819 = vdwg.mxu0
    %s820 = scalar_lea.vmem %s7, 384
    %v821 = vld [vmem:[%s820] sm:$0xff]
    %v822 = vld [vmem:[%s820 + $0x8] sm:$0xff]
    %v823 = vld [vmem:[%s820 + $0x10] sm:$0xff]
    %v824 = vld [vmem:[%s820 + $0x18] sm:$0xff]
    %v825 = vld [vmem:[%s820 + $0x20] sm:$0xff]
    %v826 = vld [vmem:[%s820 + $0x28] sm:$0xff]
    %v827 = vld [vmem:[%s820 + $0x30] sm:$0xff]
    %v828 = vld [vmem:[%s820 + $0x38] sm:$0xff]
    %v829 = vld [vmem:[%s820 + $0x40] sm:$0xff]
    %v830 = vld [vmem:[%s820 + $0x48] sm:$0xff]
    %v831 = vld [vmem:[%s820 + $0x50] sm:$0xff]
    %v832 = vld [vmem:[%s820 + $0x58] sm:$0xff]
    %v833 = vld [vmem:[%s820 + $0x60] sm:$0xff]
    %v834 = vld [vmem:[%s820 + $0x68] sm:$0xff]
    %v835 = vld [vmem:[%s820 + $0x70] sm:$0xff]
    %v836 = vld [vmem:[%s820 + $0x78] sm:$0xff]
    %v837 = vld [vmem:[%s820 + $0x80] sm:$0xff]
    %v838 = vld [vmem:[%s820 + $0x88] sm:$0xff]
    %v839 = vld [vmem:[%s820 + $0x90] sm:$0xff]
    %v840 = vld [vmem:[%s820 + $0x98] sm:$0xff]
    %v841 = vld [vmem:[%s820 + $0xa0] sm:$0xff]
    %v842 = vld [vmem:[%s820 + $0xa8] sm:$0xff]
    %v843 = vld [vmem:[%s820 + $0xb0] sm:$0xff]
    %v844 = vld [vmem:[%s820 + $0xb8] sm:$0xff]
    %v846 = vsel %vm290, %v481, 0
    %848 = vmatprep.subr.mxu0 0.0
    %849 = vmatpush1.msra.mxu0 0.0
    %850 = vmatprep.subr.mxu0 0.0
    %851 = vmatpush1.msra.mxu0 0.0
    %852 = vmatprep.subr.mxu0 0.0
    %853 = vmatpush1.msra.mxu0 0.0
    %854 = vmatprep.subr.mxu0 0.0
    %855 = vmatpush1.msra.mxu0 0.0
    %856 = vmatprep.subr.mxu0 0.0
    %857 = vmatpush1.msra.mxu0 0.0
    %858 = vmatprep.subr.mxu0 0.0
    %859 = vmatpush1.msra.mxu0 0.0
    %860 = vmatprep.subr.mxu0 0.0
    %861 = vmatpush1.msra.mxu0 0.0
    %862 = vmatprep.subr.mxu0 0.0
    %863 = vmatpush1.msra.mxu0 0.0
    %864 = vmatprep.subr.mxu0 %v843
    %865 = vmatpush1.msra.mxu0 %v842
    %866 = vmatprep.subr.mxu0 %v840
    %867 = vmatpush1.msra.mxu0 %v839
    %868 = vmatprep.subr.mxu0 %v837
    %869 = vmatpush1.msra.mxu0 %v836
    %870 = vmatprep.subr.mxu0 %v834
    %871 = vmatpush1.msra.mxu0 %v833
    %872 = vmatprep.subr.mxu0 %v831
    %873 = vmatpush1.msra.mxu0 %v830
    %874 = vmatprep.subr.mxu0 %v828
    %875 = vmatpush1.msra.mxu0 %v827
    %876 = vmatprep.subr.mxu0 %v825
    %877 = vmatpush1.msra.mxu0 %v824
    %878 = vmatprep.subr.mxu0 %v822
    %879 = vmatpush1.msra.mxu0 %v821
    %880 = vmatprep.subr.mxu0 0.0
    %881 = vmatpush2.msra.mxu0 0.0
    %882 = vmatprep.subr.mxu0 0.0
    %883 = vmatpush2.msra.mxu0 0.0
    %884 = vmatprep.subr.mxu0 0.0
    %885 = vmatpush2.msra.mxu0 0.0
    %886 = vmatprep.subr.mxu0 0.0
    %887 = vmatpush2.msra.mxu0 0.0
    %888 = vmatprep.subr.mxu0 0.0
    %889 = vmatpush2.msra.mxu0 0.0
    %890 = vmatprep.subr.mxu0 0.0
    %891 = vmatpush2.msra.mxu0 0.0
    %892 = vmatprep.subr.mxu0 0.0
    %893 = vmatpush2.msra.mxu0 0.0
    %894 = vmatprep.subr.mxu0 0.0
    %895 = vmatpush2.msra.mxu0 0.0
    %896 = vmatprep.subr.mxu0 0.0
    %897 = vmatpush2.msra.mxu0 0.0
    %898 = vmatprep.subr.mxu0 0.0
    %899 = vmatpush2.msra.mxu0 0.0
    %900 = vmatprep.subr.mxu0 0.0
    %901 = vmatpush2.msra.mxu0 0.0
    %902 = vmatprep.subr.mxu0 0.0
    %903 = vmatpush2.msra.mxu0 0.0
    %904 = vmatprep.subr.mxu0 0.0
    %905 = vmatpush2.msra.mxu0 0.0
    %906 = vmatprep.subr.mxu0 0.0
    %907 = vmatpush2.msra.mxu0 0.0
    %908 = vmatprep.subr.mxu0 0.0
    %909 = vmatpush2.msra.mxu0 0.0
    %910 = vmatprep.subr.mxu0 0.0
    %911 = vmatpush2.msra.mxu0 0.0
    %912 = vmatprep.mubr.f32.mxu0 0.0
    %913 = vmatmul.mubr.f32.gmra.mxu0 %v846
    %v914 = vpop.f32.mrf.mxu0
    %v915 = vadd.f32 0.0, %v914
    %v916 = vpop.f32.mrf.mxu0
    %v917 = vadd.f32 0.0, %v916
    %918 = vdwg.mxu0
    %919 = vmatprep.subr.mxu0 0.0
    %920 = vmatpush1.msra.mxu0 0.0
    %921 = vmatprep.subr.mxu0 0.0
    %922 = vmatpush1.msra.mxu0 0.0
    %923 = vmatprep.subr.mxu0 0.0
    %924 = vmatpush1.msra.mxu0 0.0
    %925 = vmatprep.subr.mxu0 0.0
    %926 = vmatpush1.msra.mxu0 0.0
    %927 = vmatprep.subr.mxu0 0.0
    %928 = vmatpush1.msra.mxu0 0.0
    %929 = vmatprep.subr.mxu0 0.0
    %930 = vmatpush1.msra.mxu0 0.0
    %931 = vmatprep.subr.mxu0 0.0
    %932 = vmatpush1.msra.mxu0 0.0
    %933 = vmatprep.subr.mxu0 0.0
    %934 = vmatpush1.msra.mxu0 0.0
    %935 = vmatprep.subr.mxu0 0.0
    %936 = vmatpush1.msra.mxu0 %v844
    %937 = vmatprep.subr.mxu0 0.0
    %938 = vmatpush1.msra.mxu0 %v841
    %939 = vmatprep.subr.mxu0 0.0
    %940 = vmatpush1.msra.mxu0 %v838
    %941 = vmatprep.subr.mxu0 0.0
    %942 = vmatpush1.msra.mxu0 %v835
    %943 = vmatprep.subr.mxu0 0.0
    %944 = vmatpush1.msra.mxu0 %v832
    %945 = vmatprep.subr.mxu0 0.0
    %946 = vmatpush1.msra.mxu0 %v829
    %947 = vmatprep.subr.mxu0 0.0
    %948 = vmatpush1.msra.mxu0 %v826
    %949 = vmatprep.subr.mxu0 0.0
    %950 = vmatpush1.msra.mxu0 %v823
    %951 = vmatprep.subr.mxu0 0.0
    %952 = vmatpush2.msra.mxu0 0.0
    %953 = vmatprep.subr.mxu0 0.0
    %954 = vmatpush2.msra.mxu0 0.0
    %955 = vmatprep.subr.mxu0 0.0
    %956 = vmatpush2.msra.mxu0 0.0
    %957 = vmatprep.subr.mxu0 0.0
    %958 = vmatpush2.msra.mxu0 0.0
    %959 = vmatprep.subr.mxu0 0.0
    %960 = vmatpush2.msra.mxu0 0.0
    %961 = vmatprep.subr.mxu0 0.0
    %962 = vmatpush2.msra.mxu0 0.0
    %963 = vmatprep.subr.mxu0 0.0
    %964 = vmatpush2.msra.mxu0 0.0
    %965 = vmatprep.subr.mxu0 0.0
    %966 = vmatpush2.msra.mxu0 0.0
    %967 = vmatprep.subr.mxu0 0.0
    %968 = vmatpush2.msra.mxu0 0.0
    %969 = vmatprep.subr.mxu0 0.0
    %970 = vmatpush2.msra.mxu0 0.0
    %971 = vmatprep.subr.mxu0 0.0
    %972 = vmatpush2.msra.mxu0 0.0
    %973 = vmatprep.subr.mxu0 0.0
    %974 = vmatpush2.msra.mxu0 0.0
    %975 = vmatprep.subr.mxu0 0.0
    %976 = vmatpush2.msra.mxu0 0.0
    %977 = vmatprep.subr.mxu0 0.0
    %978 = vmatpush2.msra.mxu0 0.0
    %979 = vmatprep.subr.mxu0 0.0
    %980 = vmatpush2.msra.mxu0 0.0
    %981 = vmatprep.subr.mxu0 0.0
    %982 = vmatpush2.msra.mxu0 0.0
    %983 = vmatprep.mubr.f32.mxu0 0.0
    %984 = vmatmul.mubr.f32.gmra.mxu0 %v846
    %v985 = vpop.f32.mrf.mxu0
    %v986 = vadd.f32 0.0, %v985
    %v987 = vpop.f32.mrf.mxu0
    %988 = vdwg.mxu0
    %s989 = scalar_lea.vmem %s7, 576
    %v990 = vld [vmem:[%s989] sm:$0xff]
    %v991 = vld [vmem:[%s989 + $0x8] sm:$0xff]
    %v992 = vld [vmem:[%s989 + $0x10] sm:$0xff]
    %v993 = vld [vmem:[%s989 + $0x18] sm:$0xff]
    %v994 = vld [vmem:[%s989 + $0x20] sm:$0xff]
    %v995 = vld [vmem:[%s989 + $0x28] sm:$0xff]
    %v996 = vld [vmem:[%s989 + $0x30] sm:$0xff]
    %v997 = vld [vmem:[%s989 + $0x38] sm:$0xff]
    %v998 = vld [vmem:[%s989 + $0x40] sm:$0xff]
    %v999 = vld [vmem:[%s989 + $0x48] sm:$0xff]
    %v1000 = vld [vmem:[%s989 + $0x50] sm:$0xff]
    %v1001 = vld [vmem:[%s989 + $0x58] sm:$0xff]
    %v1002 = vld [vmem:[%s989 + $0x60] sm:$0xff]
    %v1003 = vld [vmem:[%s989 + $0x68] sm:$0xff]
    %v1004 = vld [vmem:[%s989 + $0x70] sm:$0xff]
    %v1005 = vld [vmem:[%s989 + $0x78] sm:$0xff]
    %v1006 = vld [vmem:[%s989 + $0x80] sm:$0xff]
    %v1007 = vld [vmem:[%s989 + $0x88] sm:$0xff]
    %v1008 = vld [vmem:[%s989 + $0x90] sm:$0xff]
    %v1009 = vld [vmem:[%s989 + $0x98] sm:$0xff]
    %v1010 = vld [vmem:[%s989 + $0xa0] sm:$0xff]
    %v1011 = vld [vmem:[%s989 + $0xa8] sm:$0xff]
    %v1012 = vld [vmem:[%s989 + $0xb0] sm:$0xff]
    %v1013 = vld [vmem:[%s989 + $0xb8] sm:$0xff]
    %1014 = vrot.lane.b32.xlu0 %v481, 64
    %v1015 = vpop.permute.xlu0 %1014
    %v1016 = vsel %vm290, %v1015, 0
    %1018 = vmatprep.subr.mxu0 0.0
    %1019 = vmatpush1.msra.mxu0 0.0
    %1020 = vmatprep.subr.mxu0 0.0
    %1021 = vmatpush1.msra.mxu0 0.0
    %1022 = vmatprep.subr.mxu0 0.0
    %1023 = vmatpush1.msra.mxu0 0.0
    %1024 = vmatprep.subr.mxu0 0.0
    %1025 = vmatpush1.msra.mxu0 0.0
    %1026 = vmatprep.subr.mxu0 0.0
    %1027 = vmatpush1.msra.mxu0 0.0
    %1028 = vmatprep.subr.mxu0 0.0
    %1029 = vmatpush1.msra.mxu0 0.0
    %1030 = vmatprep.subr.mxu0 0.0
    %1031 = vmatpush1.msra.mxu0 0.0
    %1032 = vmatprep.subr.mxu0 0.0
    %1033 = vmatpush1.msra.mxu0 0.0
    %1034 = vmatprep.subr.mxu0 %v1012
    %1035 = vmatpush1.msra.mxu0 %v1011
    %1036 = vmatprep.subr.mxu0 %v1009
    %1037 = vmatpush1.msra.mxu0 %v1008
    %1038 = vmatprep.subr.mxu0 %v1006
    %1039 = vmatpush1.msra.mxu0 %v1005
    %1040 = vmatprep.subr.mxu0 %v1003
    %1041 = vmatpush1.msra.mxu0 %v1002
    %1042 = vmatprep.subr.mxu0 %v1000
    %1043 = vmatpush1.msra.mxu0 %v999
    %1044 = vmatprep.subr.mxu0 %v997
    %1045 = vmatpush1.msra.mxu0 %v996
    %1046 = vmatprep.subr.mxu0 %v994
    %1047 = vmatpush1.msra.mxu0 %v993
    %1048 = vmatprep.subr.mxu0 %v991
    %1049 = vmatpush1.msra.mxu0 %v990
    %1050 = vmatprep.subr.mxu0 0.0
    %1051 = vmatpush2.msra.mxu0 0.0
    %1052 = vmatprep.subr.mxu0 0.0
    %1053 = vmatpush2.msra.mxu0 0.0
    %1054 = vmatprep.subr.mxu0 0.0
    %1055 = vmatpush2.msra.mxu0 0.0
    %1056 = vmatprep.subr.mxu0 0.0
    %1057 = vmatpush2.msra.mxu0 0.0
    %1058 = vmatprep.subr.mxu0 0.0
    %1059 = vmatpush2.msra.mxu0 0.0
    %1060 = vmatprep.subr.mxu0 0.0
    %1061 = vmatpush2.msra.mxu0 0.0
    %1062 = vmatprep.subr.mxu0 0.0
    %1063 = vmatpush2.msra.mxu0 0.0
    %1064 = vmatprep.subr.mxu0 0.0
    %1065 = vmatpush2.msra.mxu0 0.0
    %1066 = vmatprep.subr.mxu0 0.0
    %1067 = vmatpush2.msra.mxu0 0.0
    %1068 = vmatprep.subr.mxu0 0.0
    %1069 = vmatpush2.msra.mxu0 0.0
    %1070 = vmatprep.subr.mxu0 0.0
    %1071 = vmatpush2.msra.mxu0 0.0
    %1072 = vmatprep.subr.mxu0 0.0
    %1073 = vmatpush2.msra.mxu0 0.0
    %1074 = vmatprep.subr.mxu0 0.0
    %1075 = vmatpush2.msra.mxu0 0.0
    %1076 = vmatprep.subr.mxu0 0.0
    %1077 = vmatpush2.msra.mxu0 0.0
    %1078 = vmatprep.subr.mxu0 0.0
    %1079 = vmatpush2.msra.mxu0 0.0
    %1080 = vmatprep.subr.mxu0 0.0
    %1081 = vmatpush2.msra.mxu0 0.0
    %1082 = vmatprep.mubr.f32.mxu0 0.0
    %1083 = vmatmul.mubr.f32.gmra.mxu0 %v1016
    %v1084 = vpop.f32.mrf.mxu0
    %v1085 = vadd.f32 0.0, %v1084
    %v1086 = vpop.f32.mrf.mxu0
    %v1087 = vadd.f32 0.0, %v1086
    %1088 = vdwg.mxu0
    %1089 = vmatprep.subr.mxu0 0.0
    %1090 = vmatpush1.msra.mxu0 0.0
    %1091 = vmatprep.subr.mxu0 0.0
    %1092 = vmatpush1.msra.mxu0 0.0
    %1093 = vmatprep.subr.mxu0 0.0
    %1094 = vmatpush1.msra.mxu0 0.0
    %1095 = vmatprep.subr.mxu0 0.0
    %1096 = vmatpush1.msra.mxu0 0.0
    %1097 = vmatprep.subr.mxu0 0.0
    %1098 = vmatpush1.msra.mxu0 0.0
    %1099 = vmatprep.subr.mxu0 0.0
    %1100 = vmatpush1.msra.mxu0 0.0
    %1101 = vmatprep.subr.mxu0 0.0
    %1102 = vmatpush1.msra.mxu0 0.0
    %1103 = vmatprep.subr.mxu0 0.0
    %1104 = vmatpush1.msra.mxu0 0.0
    %1105 = vmatprep.subr.mxu0 0.0
    %1106 = vmatpush1.msra.mxu0 %v1013
    %1107 = vmatprep.subr.mxu0 0.0
    %1108 = vmatpush1.msra.mxu0 %v1010
    %1109 = vmatprep.subr.mxu0 0.0
    %1110 = vmatpush1.msra.mxu0 %v1007
    %1111 = vmatprep.subr.mxu0 0.0
    %1112 = vmatpush1.msra.mxu0 %v1004
    %1113 = vmatprep.subr.mxu0 0.0
    %1114 = vmatpush1.msra.mxu0 %v1001
    %1115 = vmatprep.subr.mxu0 0.0
    %1116 = vmatpush1.msra.mxu0 %v998
    %1117 = vmatprep.subr.mxu0 0.0
    %1118 = vmatpush1.msra.mxu0 %v995
    %1119 = vmatprep.subr.mxu0 0.0
    %1120 = vmatpush1.msra.mxu0 %v992
    %1121 = vmatprep.subr.mxu0 0.0
    %1122 = vmatpush2.msra.mxu0 0.0
    %1123 = vmatprep.subr.mxu0 0.0
    %1124 = vmatpush2.msra.mxu0 0.0
    %1125 = vmatprep.subr.mxu0 0.0
    %1126 = vmatpush2.msra.mxu0 0.0
    %1127 = vmatprep.subr.mxu0 0.0
    %1128 = vmatpush2.msra.mxu0 0.0
    %1129 = vmatprep.subr.mxu0 0.0
    %1130 = vmatpush2.msra.mxu0 0.0
    %1131 = vmatprep.subr.mxu0 0.0
    %1132 = vmatpush2.msra.mxu0 0.0
    %1133 = vmatprep.subr.mxu0 0.0
    %1134 = vmatpush2.msra.mxu0 0.0
    %1135 = vmatprep.subr.mxu0 0.0
    %1136 = vmatpush2.msra.mxu0 0.0
    %1137 = vmatprep.subr.mxu0 0.0
    %1138 = vmatpush2.msra.mxu0 0.0
    %1139 = vmatprep.subr.mxu0 0.0
    %1140 = vmatpush2.msra.mxu0 0.0
    %1141 = vmatprep.subr.mxu0 0.0
    %1142 = vmatpush2.msra.mxu0 0.0
    %1143 = vmatprep.subr.mxu0 0.0
    %1144 = vmatpush2.msra.mxu0 0.0
    %1145 = vmatprep.subr.mxu0 0.0
    %1146 = vmatpush2.msra.mxu0 0.0
    %1147 = vmatprep.subr.mxu0 0.0
    %1148 = vmatpush2.msra.mxu0 0.0
    %1149 = vmatprep.subr.mxu0 0.0
    %1150 = vmatpush2.msra.mxu0 0.0
    %1151 = vmatprep.subr.mxu0 0.0
    %1152 = vmatpush2.msra.mxu0 0.0
    %1153 = vmatprep.mubr.f32.mxu0 0.0
    %1154 = vmatmul.mubr.f32.gmra.mxu0 %v1016
    %v1155 = vpop.f32.mrf.mxu0
    %v1156 = vadd.f32 0.0, %v1155
    %v1157 = vpop.f32.mrf.mxu0
    %1158 = vdwg.mxu0
    %1162 = vrot.lane.b32.xlu0 %v746, 104
    %v1163 = vpop.permute.xlu0 %1162
    %1164 = vrot.lane.b32.xlu0 %v748, 104
    %v1165 = vpop.permute.xlu0 %1164
    %1166 = vrot.lane.b32.xlu0 %v817, 104
    %v1167 = vpop.permute.xlu0 %1166
    %v1168 = vsel %vm132, %v1163, %v1165
    %v1169 = vsel %vm132, %v1165, %v1167
    %1177 = vrot.lane.b32.xlu0 %v915, 80
    %v1178 = vpop.permute.xlu0 %1177
    %1179 = vrot.lane.b32.xlu0 %v917, 80
    %v1180 = vpop.permute.xlu0 %1179
    %1181 = vrot.lane.b32.xlu0 %v986, 80
    %v1182 = vpop.permute.xlu0 %1181
    %vm1183 = vcmask 654336
    %v1184 = vsel %vm1183, %v1178, %v1180
    %v1185 = vsel %vm1183, %v1180, %v1182
    %1193 = vrot.lane.b32.xlu0 %v1085, 56
    %v1194 = vpop.permute.xlu0 %1193
    %1195 = vrot.lane.b32.xlu0 %v1087, 56
    %v1196 = vpop.permute.xlu0 %1195
    %1197 = vrot.lane.b32.xlu0 %v1156, 56
    %v1198 = vpop.permute.xlu0 %1197
    %vm1199 = vcmask 457728
    %v1200 = vsel %vm1199, %v1194, %v1196
    %v1201 = vsel %vm1199, %v1196, %v1198
    %v1206 = vsel %vm132, %v647, %v1163
    %v1207 = vsel %vm1183, %v1167, %v1178
    %v1208 = vsel %vm1199, %v1182, %v1194
    %v1209 = vld [vmem:[%s8] sm:$0xff]
    %v1210 = vld [vmem:[%s8 + $0x8] sm:$0xf]
    %v1213 = vlaneseq
    %v1214 = vshrl.u32 %v1213, 7
    %v1215 = vsub.s32 0, %v1214
    %v1216 = vrot.slane %v1209, %v1215
    %v1217 = vlaneseq
    %v1218 = vshrl.u32 %v1217, 7
    %v1219 = vsub.s32 1, %v1218
    %v1220 = vrot.slane %v1209, %v1219
    %v1221 = vlaneseq
    %v1222 = vshrl.u32 %v1221, 7
    %v1223 = vsub.s32 2, %v1222
    %v1224 = vrot.slane %v1209, %v1223
    %v1225 = vlaneseq
    %v1226 = vshrl.u32 %v1225, 7
    %v1227 = vsub.s32 3, %v1226
    %v1228 = vrot.slane %v1209, %v1227
    %v1229 = vlaneseq
    %v1230 = vshrl.u32 %v1229, 7
    %v1231 = vsub.s32 4, %v1230
    %v1232 = vrot.slane %v1209, %v1231
    %v1233 = vlaneseq
    %v1234 = vshrl.u32 %v1233, 7
    %v1235 = vsub.s32 5, %v1234
    %v1236 = vrot.slane %v1209, %v1235
    %v1237 = vlaneseq
    %v1238 = vshrl.u32 %v1237, 7
    %v1239 = vsub.s32 6, %v1238
    %v1240 = vrot.slane %v1209, %v1239
    %v1241 = vlaneseq
    %v1242 = vshrl.u32 %v1241, 7
    %v1243 = vsub.s32 7, %v1242
    %v1244 = vrot.slane %v1209, %v1243
    %v1245 = vlaneseq
    %v1246 = vshrl.u32 %v1245, 7
    %v1247 = vsub.s32 0, %v1246
    %v1248 = vrot.slane %v1210, %v1247
    %v1249 = vlaneseq
    %v1250 = vshrl.u32 %v1249, 7
    %v1251 = vsub.s32 1, %v1250
    %v1252 = vrot.slane %v1210, %v1251
    %v1253 = vlaneseq
    %v1254 = vshrl.u32 %v1253, 7
    %v1255 = vsub.s32 2, %v1254
    %v1256 = vrot.slane %v1210, %v1255
    %v1257 = vlaneseq
    %v1258 = vshrl.u32 %v1257, 7
    %v1259 = vsub.s32 3, %v1258
    %v1260 = vrot.slane %v1210, %v1259
    %v1273 = vadd.f32 %v576, %v1216
    %v1274 = vadd.f32 %v578, %v1220
    %v1275 = vadd.f32 %v1206, %v1224
    %v1276 = vadd.f32 %v1168, %v1228
    %v1277 = vadd.f32 %v1169, %v1232
    %v1278 = vadd.f32 %v1207, %v1236
    %v1279 = vadd.f32 %v1184, %v1240
    %v1280 = vadd.f32 %v1185, %v1244
    %v1281 = vadd.f32 %v1208, %v1248
    %v1282 = vadd.f32 %v1200, %v1252
    %v1283 = vadd.f32 %v1201, %v1256
    %v1284 = vadd.f32 %v1198, %v1260
    %v1285 = vmax.f32 %v1273, 0.0
    %v1286 = vmax.f32 %v1274, 0.0
    %v1287 = vmax.f32 %v1275, 0.0
    %v1288 = vmax.f32 %v1276, 0.0
    %v1289 = vmax.f32 %v1277, 0.0
    %v1290 = vmax.f32 %v1278, 0.0
    %v1291 = vmax.f32 %v1279, 0.0
    %v1292 = vmax.f32 %v1280, 0.0
    %v1293 = vmax.f32 %v1281, 0.0
    %v1294 = vmax.f32 %v1282, 0.0
    %v1295 = vmax.f32 %v1283, 0.0
    %v1296 = vmax.f32 %v1284, 0.0
    %v1309 = vcombine.low %v1285, %v1286
    %v1310 = vcombine.low %v1287, %v1288
    %v1312 = vunpack.c.l.s4 1983009808
    %v1313 = vunpack.c.0.s8 %v1312
    %v1314 = vlaneseq
    %v1315 = vshrl.u32 %v1314, 7
    %v1316 = vsub.s32 %v1313, %v1315
    %v1317 = vrot.slane %v1309, %v1316
    %v1319 = vunpack.c.l.s4 1983009808
    %v1320 = vunpack.c.0.s8 %v1319
    %v1321 = vlaneseq
    %v1322 = vshrl.u32 %v1321, 7
    %v1323 = vsub.s32 %v1320, %v1322
    %v1324 = vrot.slane %v1310, %v1323
    %v1325 = vcombine.low %v1317, %v1324
    %v1326 = vcombine.low %v1289, %v1290
    %v1327 = vcombine.low %v1291, %v1292
    %v1329 = vunpack.c.l.s4 1983009808
    %v1330 = vunpack.c.0.s8 %v1329
    %v1331 = vlaneseq
    %v1332 = vshrl.u32 %v1331, 7
    %v1333 = vsub.s32 %v1330, %v1332
    %v1334 = vrot.slane %v1326, %v1333
    %v1336 = vunpack.c.l.s4 1983009808
    %v1337 = vunpack.c.0.s8 %v1336
    %v1338 = vlaneseq
    %v1339 = vshrl.u32 %v1338, 7
    %v1340 = vsub.s32 %v1337, %v1339
    %v1341 = vrot.slane %v1327, %v1340
    %v1342 = vcombine.low %v1334, %v1341
    %v1343 = vcombine.low %v1293, %v1294
    %v1344 = vcombine.low %v1295, %v1296
    %v1346 = vunpack.c.l.s4 1983009808
    %v1347 = vunpack.c.0.s8 %v1346
    %v1348 = vlaneseq
    %v1349 = vshrl.u32 %v1348, 7
    %v1350 = vsub.s32 %v1347, %v1349
    %v1351 = vrot.slane %v1343, %v1350
    %v1353 = vunpack.c.l.s4 1983009808
    %v1354 = vunpack.c.0.s8 %v1353
    %v1355 = vlaneseq
    %v1356 = vshrl.u32 %v1355, 7
    %v1357 = vsub.s32 %v1354, %v1356
    %v1358 = vrot.slane %v1344, %v1357
    %v1359 = vcombine.low %v1351, %v1358
    %1363 = vst [vmem:[%s9] sm:$0xff] %v1325
    %1364 = vst [vmem:[%s9 + $0x8] sm:$0xff] %v1342
    %vm1365 = vcmask 1041408
    %vm1366 = vcmask 1043458
    %vm1367 = vmor %vm1366, %vm1365
    %vm1368 = vcmask 1045508
    %vm1369 = vmor %vm1368, %vm1367
    %vm1370 = vcmask 261126
    %vm1371 = vmor %vm1370, %vm1369
    %1372 = vst.msk [vmem:[%s9 + $0x10] sm:$0xff] %vm1371, %v1359
    // Predicated region
    $region46: #{autoencoder_forward.1} parent=1 // pred_check
      _
    $region47: #{autoencoder_forward.1} parent=1 // pred_check_branch
      %1374 = sbr.rel (0) target = $region49
    $region48: #{autoencoder_forward.1} parent=1 // pred_region
      _
    $region49: #{autoencoder_forward.1} parent=1 // pred_fallthru
      _
    // Predicated region
    $region50: #{autoencoder_forward.1} parent=1 // pred_check
      _
    $region51: #{autoencoder_forward.1} parent=1 // pred_check_branch
      %1376 = sbr.rel (0) target = $region53
    $region52: #{autoencoder_forward.1} parent=1 // pred_region
      _
    $region53: #{autoencoder_forward.1} parent=1 // pred_fallthru
      _
    %1377 = vsyncpa [#allocation3], 1
    %1378 = vsyncpa [#allocation5], 1

</llo_original>
